<compile_context>
chip_gen: v7x
topology: tpu7x:2x2x1
jax: 0.10.0
libtpu: 0.0.40
codegen_flags: <defaults>
</compile_context>

<pallas_src>
import jax
import jax.numpy as jnp
from jax import lax
from jax.experimental import pallas as pl
from jax.experimental.pallas import tpu as pltpu


def _make_matcher_kernel(num_classes: int, iou_threshold: float, G: int):
    def kernel(prop_ref, gt_ref, gtc_ref, mval_ref, midx_ref, cls_ref):
        prop = prop_ref[...]          # (B, 4, P)  lane = proposal index
        gt = gt_ref[...]              # (B, G, 4)  sublane = gt index
        gtc = gtc_ref[...]            # (B, G, 1)  int32 gt classes

        px1 = prop[:, 0:1, :]         # (B, 1, P)
        py1 = prop[:, 1:2, :]
        px2 = prop[:, 2:3, :]
        py2 = prop[:, 3:4, :]

        gx1 = gt[:, :, 0:1]           # (B, G, 1)
        gy1 = gt[:, :, 1:2]
        gx2 = gt[:, :, 2:3]
        gy2 = gt[:, :, 3:4]

        # Pairwise intersection / union, broadcast (B,G,1) x (B,1,P) -> (B,G,P).
        iw = jnp.maximum(jnp.minimum(gx2, px2) - jnp.maximum(gx1, px1), 0.0)
        ih = jnp.maximum(jnp.minimum(gy2, py2) - jnp.maximum(gy1, py1), 0.0)
        inter = iw * ih                                   # (B, G, P)
        p_area = (px2 - px1) * (py2 - py1)                # (B, 1, P)
        g_area = (gx2 - gx1) * (gy2 - gy1)                # (B, G, 1)
        union = p_area + g_area - inter                   # (B, G, P)
        # Exact divide (kept over approx reciprocal for bit-stable thresholds);
        # the inter>0 guard keeps degenerate 0/0 lanes benign.
        iou = jnp.where(inter > 0.0, inter / union, jnp.zeros_like(inter))

        # Per-proposal best GT (max over the small sublane/G axis); first index
        # among ties, matching detectron2's Matcher.
        mval = jnp.max(iou, axis=1, keepdims=True)                 # (B, 1, P)
        iota_g = lax.broadcasted_iota(jnp.int32, iou.shape, 1)     # (B, G, P)
        is_max = iou >= mval
        midx = jnp.min(jnp.where(is_max, iota_g, G), axis=1)       # (B, P)

        # Foreground test and matched-class gather via one-hot over G.
        fg = mval[:, 0, :] >= iou_threshold                        # (B, P)
        onehot = iota_g == midx[:, None, :]                        # (B, G, P)
        cls_matched = jnp.sum(jnp.where(onehot, gtc, 0), axis=1)   # (B, P)
        cls_out = jnp.where(fg, cls_matched, num_classes)          # (B, P)

        # Dense (B, P) stores: full sublane x lane tiles, one DMA each per step.
        mval_ref[...] = mval[:, 0, :]
        midx_ref[...] = midx.astype(jnp.int32)
        cls_ref[...] = cls_out.astype(jnp.int32)

    return kernel


def roi_heads_match(proposal_boxes, gt_boxes, gt_classes, *,
                    num_classes: int = 80, iou_threshold: float = 0.5,
                    images_per_block: int | None = None,
                    proposals_layout: str = "NP4"):
    """Proposal<->GT matching for all images at once.

    Args:
      proposal_boxes: (N, P, 4) f32 XYXY, or (N, 4, P) if proposals_layout=="N4P"
        (preferred: keeps the transpose out of the hot path).
      gt_boxes: (N, G, 4) f32 XYXY.
      gt_classes: (N, G) int32 in [0, num_classes).
    Returns:
      mval (N, P) f32   -- matched IoU per proposal
      midx (N, P) i32   -- matched GT index per proposal (first among ties)
      mlab (N, P) i32   -- matcher label: 1 fg / 0 bg
      cls  (N, P) i32   -- matched GT class, background = num_classes
    """
    if proposals_layout == "N4P":
        prop_t = proposal_boxes.astype(jnp.float32)                     # (N, 4, P)
    else:
        # NOTE: for peak perf store proposals channel-major (N, 4, P) upstream;
        # this transpose is a separate XLA pass outside the kernel.
        prop_t = jnp.transpose(proposal_boxes, (0, 2, 1)).astype(jnp.float32)

    N, _, P = prop_t.shape
    G = gt_boxes.shape[1]

    # --- pad proposals to a lane-dense multiple of 128 ----------------------
    P_pad = ((P + 127) // 128) * 128
    if P_pad != P:
        prop_t = jnp.pad(prop_t, ((0, 0), (0, 0), (0, P_pad - P)))

    # --- choose image block size B and pad N --------------------------------
    if images_per_block is None:
        # B=8 keeps output blocks sublane-aligned and >=2 grid steps for N>=16
        # (v7x dual-TC); tiny batches collapse to a single block.
        B = 8 if N >= 16 else N
    else:
        B = images_per_block
        assert B % 8 == 0 or B >= N, (
            "images_per_block must be a multiple of 8 or cover the whole batch")
    num_blocks = pl.cdiv(N, B)
    N_pad = num_blocks * B

    gt_in = gt_boxes.astype(jnp.float32)                                 # (N, G, 4)
    gtc_in = gt_classes.astype(jnp.int32)[..., None]                     # (N, G, 1)
    if N_pad != N:
        prop_t = jnp.pad(prop_t, ((0, N_pad - N), (0, 0), (0, 0)))
        gt_in = jnp.pad(gt_in, ((0, N_pad - N), (0, 0), (0, 0)))
        gtc_in = jnp.pad(gtc_in, ((0, N_pad - N), (0, 0), (0, 0)))

    kernel = _make_matcher_kernel(num_classes, iou_threshold, G)

    out_shapes = (
        jax.ShapeDtypeStruct((N_pad, P_pad), jnp.float32),   # matched IoU values
        jax.ShapeDtypeStruct((N_pad, P_pad), jnp.int32),     # matched GT indices
        jax.ShapeDtypeStruct((N_pad, P_pad), jnp.int32),     # per-proposal class
    )

    grid_spec = pl.GridSpec(
        grid=(num_blocks,),
        in_specs=[
            pl.BlockSpec((B, 4, P_pad), lambda i: (i, 0, 0)),
            pl.BlockSpec((B, G, 4), lambda i: (i, 0, 0)),
            pl.BlockSpec((B, G, 1), lambda i: (i, 0, 0)),
        ],
        out_specs=[
            pl.BlockSpec((B, P_pad), lambda i: (i, 0)),
            pl.BlockSpec((B, P_pad), lambda i: (i, 0)),
            pl.BlockSpec((B, P_pad), lambda i: (i, 0)),
        ],
    )

    mval, midx, cls = pl.pallas_call(
        kernel,
        out_shape=out_shapes,
        grid_spec=grid_spec,
        compiler_params=pltpu.CompilerParams(dimension_semantics=("parallel",)),
    )(prop_t, gt_in, gtc_in)

    mval = mval[:N, :P]
    midx = midx[:N, :P]
    cls = cls[:N, :P]
    mlab = (mval >= iou_threshold).astype(jnp.int32)   # derived host-side (one less output DMA)
    return mval, midx, mlab, cls


def _ref_match(proposal_boxes, gt_boxes, gt_classes, num_classes, thr):
    px1, py1, px2, py2 = [proposal_boxes[..., k] for k in range(4)]   # (N, P)
    gx1, gy1, gx2, gy2 = [gt_boxes[..., k] for k in range(4)]         # (N, G)
    iw = jnp.maximum(jnp.minimum(gx2[:, :, None], px2[:, None, :]) -
                     jnp.maximum(gx1[:, :, None], px1[:, None, :]), 0.0)
    ih = jnp.maximum(jnp.minimum(gy2[:, :, None], py2[:, None, :]) -
                     jnp.maximum(gy1[:, :, None], py1[:, None, :]), 0.0)
    inter = iw * ih
    p_area = (px2 - px1) * (py2 - py1)
    g_area = (gx2 - gx1) * (gy2 - gy1)
    union = p_area[:, None, :] + g_area[:, :, None] - inter
    iou = jnp.where(inter > 0, inter / union, 0.0)
    mval = jnp.max(iou, axis=1)
    G = gt_boxes.shape[1]
    iota = jnp.arange(G)[None, :, None]
    midx = jnp.min(jnp.where(iou >= mval[:, None, :], iota, G), axis=1)
    fg = mval >= thr
    cls = jnp.where(fg, jnp.take_along_axis(gt_classes, midx, axis=1), num_classes)
    return mval, midx.astype(jnp.int32), fg.astype(jnp.int32), cls.astype(jnp.int32)


if __name__ == "__main__":
    key = jax.random.PRNGKey(0)
    N, P, G, NUM_CLASSES = 16, 256, 8, 8

    k1, k2, k3, k4, k5 = jax.random.split(key, 5)
    # deterministic synthetic proposal / gt boxes (XYXY, positive width/height)
    p_xy = jax.random.uniform(k1, (N, P, 2), minval=0.0, maxval=50.0)
    p_wh = jax.random.uniform(k2, (N, P, 2), minval=4.0, maxval=40.0)
    proposal_boxes = jnp.concatenate([p_xy, p_xy + p_wh], axis=-1)      # (N, P, 4)

    g_xy = jax.random.uniform(k3, (N, G, 2), minval=0.0, maxval=50.0)
    g_wh = jax.random.uniform(k4, (N, G, 2), minval=4.0, maxval=40.0)
    gt_boxes = jnp.concatenate([g_xy, g_xy + g_wh], axis=-1)            # (N, G, 4)
    gt_classes = jax.random.randint(k5, (N, G), 0, NUM_CLASSES)

    # "Upstream" channel-major proposal layout -> no transpose in the hot path.
    proposal_boxes_t = jnp.transpose(proposal_boxes, (0, 2, 1))         # (N, 4, P)

    mval, midx, mlab, cls = roi_heads_match(
        proposal_boxes_t, gt_boxes, gt_classes,
        num_classes=NUM_CLASSES, iou_threshold=0.5, proposals_layout="N4P")
    mval, midx, mlab, cls = jax.block_until_ready((mval, midx, mlab, cls))

    r_mval, r_midx, r_mlab, r_cls = _ref_match(
        proposal_boxes, gt_boxes, gt_classes, NUM_CLASSES, 0.5)

    assert jnp.allclose(mval, r_mval, atol=1e-5), "matched value mismatch"
    assert jnp.array_equal(midx, r_midx), "matched index mismatch"
    assert jnp.array_equal(mlab, r_mlab), "matcher label mismatch"
    assert jnp.array_equal(cls, r_cls), "gt class assignment mismatch"

    print("KERNEL_OK")
</pallas_src>

<mosaic_0001>
module attributes {stable_mosaic.version = 11 : i64} {
  func.func @kernel(%arg0: i32, %arg1: memref<8x4x256xf32, #tpu.memory_space<vmem>>, %arg2: memref<8x8x4xf32, #tpu.memory_space<vmem>>, %arg3: memref<8x8x1xi32, #tpu.memory_space<vmem>>, %arg4: memref<8x256xf32, #tpu.memory_space<vmem>>, %arg5: memref<8x256xi32, #tpu.memory_space<vmem>>, %arg6: memref<8x256xi32, #tpu.memory_space<vmem>>) attributes {dimension_semantics = [#tpu.dimension_semantics<parallel>], iteration_bounds = array<i64: 2>, scalar_prefetch = 0 : i64, scratch_operands = 0 : i64, tpu.core_type = #tpu.core_type<tc>, window_params = [{transform_indices = @transform_0, window_bounds = array<i64: 8, 4, 256>}, {transform_indices = @transform_1, window_bounds = array<i64: 8, 8, 4>}, {transform_indices = @transform_2, window_bounds = array<i64: 8, 8, 1>}, {transform_indices = @transform_3, window_bounds = array<i64: 8, 256>}, {transform_indices = @transform_4, window_bounds = array<i64: 8, 256>}, {transform_indices = @transform_5, window_bounds = array<i64: 8, 256>}]} {
    %c0 = arith.constant 0 : index
    %c0_0 = arith.constant 0 : index
    %c0_1 = arith.constant 0 : index
    %0 = vector.load %arg1[%c0, %c0_0, %c0_1] : memref<8x4x256xf32, #tpu.memory_space<vmem>>, vector<8x4x256xf32>
    %c0_2 = arith.constant 0 : index
    %c0_3 = arith.constant 0 : index
    %c0_4 = arith.constant 0 : index
    %1 = vector.load %arg2[%c0_2, %c0_3, %c0_4] : memref<8x8x4xf32, #tpu.memory_space<vmem>>, vector<8x8x4xf32>
    %c0_5 = arith.constant 0 : index
    %c0_6 = arith.constant 0 : index
    %c0_7 = arith.constant 0 : index
    %2 = vector.load %arg3[%c0_5, %c0_6, %c0_7] : memref<8x8x1xi32, #tpu.memory_space<vmem>>, vector<8x8x1xi32>
    %3 = vector.extract_strided_slice %0 {offsets = [0, 0, 0], sizes = [8, 1, 256], strides = [1, 1, 1]} : vector<8x4x256xf32> to vector<8x1x256xf32>
    %4 = vector.extract_strided_slice %0 {offsets = [0, 1, 0], sizes = [8, 1, 256], strides = [1, 1, 1]} : vector<8x4x256xf32> to vector<8x1x256xf32>
    %5 = vector.extract_strided_slice %0 {offsets = [0, 2, 0], sizes = [8, 1, 256], strides = [1, 1, 1]} : vector<8x4x256xf32> to vector<8x1x256xf32>
    %6 = vector.extract_strided_slice %0 {offsets = [0, 3, 0], sizes = [8, 1, 256], strides = [1, 1, 1]} : vector<8x4x256xf32> to vector<8x1x256xf32>
    %7 = vector.extract_strided_slice %1 {offsets = [0, 0, 0], sizes = [8, 8, 1], strides = [1, 1, 1]} : vector<8x8x4xf32> to vector<8x8x1xf32>
    %8 = vector.extract_strided_slice %1 {offsets = [0, 0, 1], sizes = [8, 8, 1], strides = [1, 1, 1]} : vector<8x8x4xf32> to vector<8x8x1xf32>
    %9 = vector.extract_strided_slice %1 {offsets = [0, 0, 2], sizes = [8, 8, 1], strides = [1, 1, 1]} : vector<8x8x4xf32> to vector<8x8x1xf32>
    %10 = vector.extract_strided_slice %1 {offsets = [0, 0, 3], sizes = [8, 8, 1], strides = [1, 1, 1]} : vector<8x8x4xf32> to vector<8x8x1xf32>
    %11 = vector.broadcast %9 : vector<8x8x1xf32> to vector<8x8x256xf32>
    %12 = vector.broadcast %5 : vector<8x1x256xf32> to vector<8x8x256xf32>
    %13 = arith.minimumf %11, %12 : vector<8x8x256xf32>
    %14 = vector.broadcast %7 : vector<8x8x1xf32> to vector<8x8x256xf32>
    %15 = vector.broadcast %3 : vector<8x1x256xf32> to vector<8x8x256xf32>
    %16 = arith.maximumf %14, %15 : vector<8x8x256xf32>
    %17 = arith.subf %13, %16 : vector<8x8x256xf32>
    %cst = arith.constant 0.000000e+00 : f32
    %18 = vector.broadcast %cst : f32 to vector<8x8x256xf32>
    %19 = arith.maximumf %17, %18 : vector<8x8x256xf32>
    %20 = vector.broadcast %10 : vector<8x8x1xf32> to vector<8x8x256xf32>
    %21 = vector.broadcast %6 : vector<8x1x256xf32> to vector<8x8x256xf32>
    %22 = arith.minimumf %20, %21 : vector<8x8x256xf32>
    %23 = vector.broadcast %8 : vector<8x8x1xf32> to vector<8x8x256xf32>
    %24 = vector.broadcast %4 : vector<8x1x256xf32> to vector<8x8x256xf32>
    %25 = arith.maximumf %23, %24 : vector<8x8x256xf32>
    %26 = arith.subf %22, %25 : vector<8x8x256xf32>
    %cst_8 = arith.constant 0.000000e+00 : f32
    %27 = vector.broadcast %cst_8 : f32 to vector<8x8x256xf32>
    %28 = arith.maximumf %26, %27 : vector<8x8x256xf32>
    %29 = arith.mulf %19, %28 : vector<8x8x256xf32>
    %30 = arith.subf %5, %3 : vector<8x1x256xf32>
    %31 = arith.subf %6, %4 : vector<8x1x256xf32>
    %32 = arith.mulf %30, %31 : vector<8x1x256xf32>
    %33 = arith.subf %9, %7 : vector<8x8x1xf32>
    %34 = arith.subf %10, %8 : vector<8x8x1xf32>
    %35 = arith.mulf %33, %34 : vector<8x8x1xf32>
    %36 = vector.broadcast %32 : vector<8x1x256xf32> to vector<8x8x256xf32>
    %37 = vector.broadcast %35 : vector<8x8x1xf32> to vector<8x8x256xf32>
    %38 = arith.addf %36, %37 : vector<8x8x256xf32>
    %39 = arith.subf %38, %29 : vector<8x8x256xf32>
    %cst_9 = arith.constant 0.000000e+00 : f32
    %40 = vector.broadcast %cst_9 : f32 to vector<8x8x256xf32>
    %41 = arith.cmpf ogt, %29, %40 : vector<8x8x256xf32>
    %42 = arith.divf %29, %39 : vector<8x8x256xf32>
    %cst_10 = arith.constant 0.000000e+00 : f32
    %43 = vector.broadcast %cst_10 : f32 to vector<8x8x256xf32>
    %44 = arith.select %41, %42, %43 : vector<8x8x256xi1>, vector<8x8x256xf32>
    %cst_11 = arith.constant dense<0xFF800000> : vector<8x256xf32>
    %45 = vector.multi_reduction <maximumf>, %44, %cst_11 [1] : vector<8x8x256xf32> to vector<8x256xf32>
    %46 = vector.shape_cast %45 : vector<8x256xf32> to vector<8x1x256xf32>
    %47 = tpu.iota {dimensions = array<i32: 1>} : vector<8x8x256xi32>
    %48 = vector.broadcast %46 : vector<8x1x256xf32> to vector<8x8x256xf32>
    %49 = arith.cmpf oge, %44, %48 : vector<8x8x256xf32>
    %c8_i32 = arith.constant 8 : i32
    %50 = vector.broadcast %c8_i32 : i32 to vector<8x8x256xi32>
    %51 = arith.select %49, %47, %50 : vector<8x8x256xi1>, vector<8x8x256xi32>
    %cst_12 = arith.constant dense<2147483647> : vector<8x256xi32>
    %52 = vector.multi_reduction <minsi>, %51, %cst_12 [1] : vector<8x8x256xi32> to vector<8x256xi32>
    %53 = vector.shape_cast %46 : vector<8x1x256xf32> to vector<8x256xf32>
    %cst_13 = arith.constant 5.000000e-01 : f32
    %54 = vector.broadcast %cst_13 : f32 to vector<8x256xf32>
    %55 = arith.cmpf oge, %53, %54 : vector<8x256xf32>
    %56 = vector.shape_cast %52 : vector<8x256xi32> to vector<8x1x256xi32>
    %57 = vector.broadcast %56 : vector<8x1x256xi32> to vector<8x8x256xi32>
    %58 = arith.cmpi eq, %47, %57 : vector<8x8x256xi32>
    %c0_i32 = arith.constant 0 : i32
    %59 = vector.shape_cast %2 : vector<8x8x1xi32> to vector<8x8x1xi32>
    %60 = vector.broadcast %59 : vector<8x8x1xi32> to vector<8x8x256xi32>
    %61 = vector.broadcast %c0_i32 : i32 to vector<8x8x256xi32>
    %62 = arith.select %58, %60, %61 : vector<8x8x256xi1>, vector<8x8x256xi32>
    %cst_14 = arith.constant dense<0> : vector<8x256xi32>
    %63 = vector.multi_reduction <add>, %62, %cst_14 [1] : vector<8x8x256xi32> to vector<8x256xi32>
    %c8_i32_15 = arith.constant 8 : i32
    %64 = vector.broadcast %c8_i32_15 : i32 to vector<8x256xi32>
    %65 = arith.select %55, %63, %64 : vector<8x256xi1>, vector<8x256xi32>
    %66 = vector.shape_cast %46 : vector<8x1x256xf32> to vector<8x256xf32>
    %c0_16 = arith.constant 0 : index
    %c0_17 = arith.constant 0 : index
    %67 = vector.load %arg4[%c0_16, %c0_17] : memref<8x256xf32, #tpu.memory_space<vmem>>, vector<8x256xf32>
    tpu.vector_store %arg4[%c0_16, %c0_17], %66 {strides = array<i32>} : memref<8x256xf32, #tpu.memory_space<vmem>>, vector<8x256xf32>,
    %c0_18 = arith.constant 0 : index
    %c0_19 = arith.constant 0 : index
    %68 = vector.load %arg5[%c0_18, %c0_19] : memref<8x256xi32, #tpu.memory_space<vmem>>, vector<8x256xi32>
    tpu.vector_store %arg5[%c0_18, %c0_19], %52 {strides = array<i32>} : memref<8x256xi32, #tpu.memory_space<vmem>>, vector<8x256xi32>,
    %c0_20 = arith.constant 0 : index
    %c0_21 = arith.constant 0 : index
    %69 = vector.load %arg6[%c0_20, %c0_21] : memref<8x256xi32, #tpu.memory_space<vmem>>, vector<8x256xi32>
    tpu.vector_store %arg6[%c0_20, %c0_21], %65 {strides = array<i32>} : memref<8x256xi32, #tpu.memory_space<vmem>>, vector<8x256xi32>,
    return
  }
  func.func @transform_0(%arg0: i32) -> (i32, i32, i32) {
    %c0_i32 = arith.constant 0 : i32
    %c0_i32_0 = arith.constant 0 : i32
    %c0_i32_1 = arith.constant 0 : i32
    return %arg0, %c0_i32, %c0_i32_0 : i32, i32, i32
  }
  func.func @transform_1(%arg0: i32) -> (i32, i32, i32) {
    %c0_i32 = arith.constant 0 : i32
    %c0_i32_0 = arith.constant 0 : i32
    %c0_i32_1 = arith.constant 0 : i32
    return %arg0, %c0_i32, %c0_i32_0 : i32, i32, i32
  }
  func.func @transform_2(%arg0: i32) -> (i32, i32, i32) {
    %c0_i32 = arith.constant 0 : i32
    %c0_i32_0 = arith.constant 0 : i32
    %c0_i32_1 = arith.constant 0 : i32
    return %arg0, %c0_i32, %c0_i32_0 : i32, i32, i32
  }
  func.func @transform_3(%arg0: i32) -> (i32, i32) {
    %c0_i32 = arith.constant 0 : i32
    %c0_i32_0 = arith.constant 0 : i32
    return %arg0, %c0_i32 : i32, i32
  }
  func.func @transform_4(%arg0: i32) -> (i32, i32) {
    %c0_i32 = arith.constant 0 : i32
    %c0_i32_0 = arith.constant 0 : i32
    return %arg0, %c0_i32 : i32, i32
  }
  func.func @transform_5(%arg0: i32) -> (i32, i32) {
    %c0_i32 = arith.constant 0 : i32
    %c0_i32_0 = arith.constant 0 : i32
    return %arg0, %c0_i32 : i32, i32
  }
}

</mosaic_0001>

<llo_original>
// kernel: tpu_custom_call.1
$region0: #{tpu_custom_call.1}
  #allocation0 [shape = 'u32[]', space=smem, size = 0x4, offset = 0x4, fixed_abs, tag = 'smem constant byte address 0x4 - core index']
  #allocation1 [shape = 'u32[144,128]{1,0:T(1,128)}', space=vmem, size = 0x12000, scoped, tag = 'internal scratch']
  %s0 = inlined_call_operand.vmem [shape: f32[16,4,256], index: 0, kind: input, shape index: {}]
  %s1 = inlined_call_operand.vmem [shape: f32[16,8,4], index: 1, kind: input, shape index: {}]
  %s2 = inlined_call_operand.vmem [shape: s32[16,8,1], index: 2, kind: input, shape index: {}]
  %s3 = inlined_call_operand.hbm [shape: f32[16,256], index: 3, kind: output, shape index: {0}]
  %s4 = inlined_call_operand.hbm [shape: s32[16,256], index: 4, kind: output, shape index: {1}]
  %s5 = inlined_call_operand.hbm [shape: s32[16,256], index: 5, kind: output, shape index: {2}]
  %6 = xla_tuple %s3, %s4, %s5
  %s7 = sld [smem:[#allocation0]]
  $region61: #{tpu_custom_call.1} parent=0
    _
  %s9 = ssub.s32 1, %s7
  %s10 = scalar_select 0, %s9, %s7
  $region1: #{tpu_custom_call.1} parent=0
    #allocation2 [shape = 'u8[16384]{0}', space=vmem, size = 0x4000, scoped, tag = 'output window, operand 0']
    #allocation3 [shape = 's32[2]{0}', space=sflag, size = 0x8, scoped, tag = 'scoped memory for tpu_custom_call.1']
    #allocation4 [shape = 'u8[16384]{0}', space=vmem, size = 0x4000, scoped, tag = 'output window, operand 1']
    #allocation5 [shape = 's32[2]{0}', space=sflag, size = 0x8, scoped, tag = 'scoped memory for tpu_custom_call.1']
    #allocation6 [shape = 'u8[16384]{0}', space=vmem, size = 0x4000, scoped, tag = 'output window, operand 2']
    %11 = vsyncpa [#allocation3], 0
    %s12 = scalar_lea.sflag [#allocation3], 1
    %13 = vsyncpa %s12, 0
    %14 = vsyncpa [#allocation5], 0
    %s15 = scalar_lea.sflag [#allocation5], 1
    %16 = vsyncpa %s15, 0
    loop: start=0, step=1, limit=4
    $region2: #{tpu_custom_call.1} parent=1 // loop_pre_header
      _
    $region3: #{tpu_custom_call.1} parent=1 // loop_header
      %s18 = sphi 0, %s22
      %p19 = scmp.ge.s32.totalorder %s18, 4
      %s28 = sphi 0, %s30
      %s31 = sphi 0, %s28
      %s32 = sphi 0, %s31
      %s48 = sphi 0, %s32
      %s54 = sphi 0, %s56
      %s57 = sphi 0, %s54
      %s58 = sphi 0, %s57
      %s74 = sphi 0, %s58
      %s80 = sphi 0, %s82
      %s83 = sphi 0, %s80
      %s84 = sphi 0, %s83
      %s100 = sphi 0, %s84
      %s106 = sphi 0, %s108
      %s109 = sphi 0, %s106
      %s110 = sphi 0, %s109
      %s126 = sphi 0, %s110
      %s132 = sphi 0, %s134
      %s135 = sphi 0, %s132
      %s136 = sphi 0, %s135
      %s152 = sphi 0, %s136
      %s158 = sphi 0, %s160
      %s161 = sphi 0, %s158
      %s162 = sphi 0, %s161
      %s178 = sphi 0, %s162
    $region4: #{tpu_custom_call.1} parent=1 // loop_header_branch
      %21 = sbr.rel (%p19) target = $region8
    $region5: #{tpu_custom_call.1} parent=1 // loop_body
      %s23 = ssub.s32 %s18, 1
      %s24 = ssub.s32 %s18, 2
      %s25 = sadd.s32 %s18, 1
      %s26 = ssub.s32 %s18, %s25
      %p27 = scmp.eq.s32.totalorder %s26, 0
      %s29 = sadd.s32 %s28, 1
      %s30 = scalar_select %p27, %s28, %s29
      %p33 = pneg %p27
      %p34 = scmp.eq.s32.totalorder %s18, 1
      %p35 = por %p33, %p34
      %p36 = scmp.ne.s32.totalorder %s28, %s31
      %p37 = scmp.eq.s32.totalorder %s18, 0
      %p38 = por %p36, %p37
      %p39 = scmp.ne.s32.totalorder %s28, %s31
      %p40 = scmp.eq.s32.totalorder %s23, 1
      %p41 = por %p39, %p40
      %p42 = scmp.ne.s32.totalorder %s31, %s32
      %p43 = scmp.eq.s32.totalorder %s23, 0
      %p44 = por %p42, %p43
      %p45 = scmp.ne.s32.totalorder %s31, %s32
      %p46 = scmp.eq.s32.totalorder %s24, 1
      %p47 = por %p45, %p46
      %p49 = scmp.ne.s32.totalorder %s32, %s48
      %p50 = scmp.eq.s32.totalorder %s24, 0
      %p51 = por %p49, %p50
      %s52 = ssub.s32 %s18, %s25
      %p53 = scmp.eq.s32.totalorder %s52, 0
      %s55 = sadd.s32 %s54, 1
      %s56 = scalar_select %p53, %s54, %s55
      %p59 = pneg %p53
      %p60 = scmp.eq.s32.totalorder %s18, 1
      %p61 = por %p59, %p60
      %p62 = scmp.ne.s32.totalorder %s54, %s57
      %p63 = scmp.eq.s32.totalorder %s18, 0
      %p64 = por %p62, %p63
      %p65 = scmp.ne.s32.totalorder %s54, %s57
      %p66 = scmp.eq.s32.totalorder %s23, 1
      %p67 = por %p65, %p66
      %p68 = scmp.ne.s32.totalorder %s57, %s58
      %p69 = scmp.eq.s32.totalorder %s23, 0
      %p70 = por %p68, %p69
      %p71 = scmp.ne.s32.totalorder %s57, %s58
      %p72 = scmp.eq.s32.totalorder %s24, 1
      %p73 = por %p71, %p72
      %p75 = scmp.ne.s32.totalorder %s58, %s74
      %p76 = scmp.eq.s32.totalorder %s24, 0
      %p77 = por %p75, %p76
      %s78 = ssub.s32 %s18, %s25
      %p79 = scmp.eq.s32.totalorder %s78, 0
      %s81 = sadd.s32 %s80, 1
      %s82 = scalar_select %p79, %s80, %s81
      %p85 = pneg %p79
      %p86 = scmp.eq.s32.totalorder %s18, 1
      %p87 = por %p85, %p86
      %p88 = scmp.ne.s32.totalorder %s80, %s83
      %p89 = scmp.eq.s32.totalorder %s18, 0
      %p90 = por %p88, %p89
      %p91 = scmp.ne.s32.totalorder %s80, %s83
      %p92 = scmp.eq.s32.totalorder %s23, 1
      %p93 = por %p91, %p92
      %p94 = scmp.ne.s32.totalorder %s83, %s84
      %p95 = scmp.eq.s32.totalorder %s23, 0
      %p96 = por %p94, %p95
      %p97 = scmp.ne.s32.totalorder %s83, %s84
      %p98 = scmp.eq.s32.totalorder %s24, 1
      %p99 = por %p97, %p98
      %p101 = scmp.ne.s32.totalorder %s84, %s100
      %p102 = scmp.eq.s32.totalorder %s24, 0
      %p103 = por %p101, %p102
      %s104 = ssub.s32 %s18, %s25
      %p105 = scmp.eq.s32.totalorder %s104, 0
      %s107 = sadd.s32 %s106, 1
      %s108 = scalar_select %p105, %s106, %s107
      %p111 = pneg %p105
      %p112 = scmp.eq.s32.totalorder %s18, 1
      %p113 = por %p111, %p112
      %p114 = scmp.ne.s32.totalorder %s106, %s109
      %p115 = scmp.eq.s32.totalorder %s18, 0
      %p116 = por %p114, %p115
      %p117 = scmp.ne.s32.totalorder %s106, %s109
      %p118 = scmp.eq.s32.totalorder %s23, 1
      %p119 = por %p117, %p118
      %p120 = scmp.ne.s32.totalorder %s109, %s110
      %p121 = scmp.eq.s32.totalorder %s23, 0
      %p122 = por %p120, %p121
      %p123 = scmp.ne.s32.totalorder %s109, %s110
      %p124 = scmp.eq.s32.totalorder %s24, 1
      %p125 = por %p123, %p124
      %p127 = scmp.ne.s32.totalorder %s110, %s126
      %p128 = scmp.eq.s32.totalorder %s24, 0
      %p129 = por %p127, %p128
      %s130 = ssub.s32 %s18, %s25
      %p131 = scmp.eq.s32.totalorder %s130, 0
      %s133 = sadd.s32 %s132, 1
      %s134 = scalar_select %p131, %s132, %s133
      %p137 = pneg %p131
      %p138 = scmp.eq.s32.totalorder %s18, 1
      %p139 = por %p137, %p138
      %p140 = scmp.ne.s32.totalorder %s132, %s135
      %p141 = scmp.eq.s32.totalorder %s18, 0
      %p142 = por %p140, %p141
      %p143 = scmp.ne.s32.totalorder %s132, %s135
      %p144 = scmp.eq.s32.totalorder %s23, 1
      %p145 = por %p143, %p144
      %p146 = scmp.ne.s32.totalorder %s135, %s136
      %p147 = scmp.eq.s32.totalorder %s23, 0
      %p148 = por %p146, %p147
      %p149 = scmp.ne.s32.totalorder %s135, %s136
      %p150 = scmp.eq.s32.totalorder %s24, 1
      %p151 = por %p149, %p150
      %p153 = scmp.ne.s32.totalorder %s136, %s152
      %p154 = scmp.eq.s32.totalorder %s24, 0
      %p155 = por %p153, %p154
      %s156 = ssub.s32 %s18, %s25
      %p157 = scmp.eq.s32.totalorder %s156, 0
      %s159 = sadd.s32 %s158, 1
      %s160 = scalar_select %p157, %s158, %s159
      %p163 = pneg %p157
      %p164 = scmp.eq.s32.totalorder %s18, 1
      %p165 = por %p163, %p164
      %p166 = scmp.ne.s32.totalorder %s158, %s161
      %p167 = scmp.eq.s32.totalorder %s18, 0
      %p168 = por %p166, %p167
      %p169 = scmp.ne.s32.totalorder %s158, %s161
      %p170 = scmp.eq.s32.totalorder %s23, 1
      %p171 = por %p169, %p170
      %p172 = scmp.ne.s32.totalorder %s161, %s162
      %p173 = scmp.eq.s32.totalorder %s23, 0
      %p174 = por %p172, %p173
      %p175 = scmp.ne.s32.totalorder %s161, %s162
      %p176 = scmp.eq.s32.totalorder %s24, 1
      %p177 = por %p175, %p176
      %p179 = scmp.ne.s32.totalorder %s162, %s178
      %p180 = scmp.eq.s32.totalorder %s24, 0
      %p181 = por %p179, %p180
      %p182 = scmp.le.s32.totalorder 1, %s18
      %p183 = scmp.lt.s32.totalorder %s18, 3
      %p184 = pnand %p182, %p183
      %p185 = pneg %p184
      // Predicated region
      $region9: #{tpu_custom_call.1} parent=5 // pred_check
        _
      $region10: #{tpu_custom_call.1} parent=5 // pred_check_branch
        %187 = sbr.rel (%p184) target = $region12
      $region11: #{tpu_custom_call.1} parent=5 // pred_region
        %s188 = ssub.s32 %s18, 1
      $region12: #{tpu_custom_call.1} parent=5 // pred_fallthru
        _
      %p189 = scmp.lt.s32.totalorder %s18, 2
      // Predicated region
      $region13: #{tpu_custom_call.1} parent=5 // pred_check
        %p190 = pneg %p189
      $region14: #{tpu_custom_call.1} parent=5 // pred_check_branch
        %192 = sbr.rel (%p190) target = $region16
      $region15: #{tpu_custom_call.1} parent=5 // pred_region
        // Predicated region
        $region17: #{tpu_custom_call.1} parent=15 // pred_check
          %p193 = pneg %p38
        $region18: #{tpu_custom_call.1} parent=15 // pred_check_branch
          %195 = sbr.rel (%p193) target = $region20
        $region19: #{tpu_custom_call.1} parent=15 // pred_region
          %s196 = smul.u32 8, %s18
          %p197 = scmp.lt.s32.totalorder %s196, 15
          %s198 = scalar_select %p197, %s196, 15
          %s199 = smul.addr %s198, 2
          %s200 = smul.addr %s199, 4
          %s201 = scalar_lea.vmem %s0, %s200
          %s202 = smul.u32 8, %s18
        $region20: #{tpu_custom_call.1} parent=15 // pred_fallthru
          _
        // Predicated region
        $region21: #{tpu_custom_call.1} parent=15 // pred_check
          %p203 = pneg %p64
        $region22: #{tpu_custom_call.1} parent=15 // pred_check_branch
          %205 = sbr.rel (%p203) target = $region24
        $region23: #{tpu_custom_call.1} parent=15 // pred_region
          %s206 = smul.u32 8, %s18
          %p207 = scmp.lt.s32.totalorder %s206, 15
          %s208 = scalar_select %p207, %s206, 15
          %s209 = smul.addr %s208, 8
          %s210 = scalar_lea.vmem %s1, %s209
          %s211 = smul.u32 8, %s18
        $region24: #{tpu_custom_call.1} parent=15 // pred_fallthru
          _
        // Predicated region
        $region25: #{tpu_custom_call.1} parent=15 // pred_check
          %p212 = pneg %p90
        $region26: #{tpu_custom_call.1} parent=15 // pred_check_branch
          %214 = sbr.rel (%p212) target = $region28
        $region27: #{tpu_custom_call.1} parent=15 // pred_region
          %s215 = smul.u32 8, %s18
          %p216 = scmp.lt.s32.totalorder %s215, 15
          %s217 = scalar_select %p216, %s215, 15
          %s218 = smul.addr %s217, 8
          %s219 = scalar_lea.vmem %s2, %s218
          %s220 = smul.u32 8, %s18
        $region28: #{tpu_custom_call.1} parent=15 // pred_fallthru
          _
      $region16: #{tpu_custom_call.1} parent=5 // pred_fallthru
        _
      %p221 = scmp.le.s32.totalorder 1, %s18
      %p222 = scmp.lt.s32.totalorder %s18, 3
      %p223 = pnand %p221, %p222
      %p224 = pneg %p223
      // Predicated region
      $region29: #{tpu_custom_call.1} parent=5 // pred_check
        _
      $region30: #{tpu_custom_call.1} parent=5 // pred_check_branch
        %226 = sbr.rel (%p223) target = $region32
      $region31: #{tpu_custom_call.1} parent=5 // pred_region
        %s227 = ssub.s32 %s18, 1
        %s228 = smul.u32 8, %s23
        %p229 = scmp.lt.s32.totalorder %s228, 15
        %s230 = scalar_select %p229, %s228, 15
        %s231 = smul.addr %s230, 2
        %s232 = smul.addr %s231, 4
        %s233 = scalar_lea.vmem %s0, %s232
        %p234 = pneg %p44
        %p235 = pneg %p41
        %s236 = smul.u32 8, %s23
        %p237 = scmp.lt.s32.totalorder %s236, 15
        %s238 = scalar_select %p237, %s236, 15
        %s239 = smul.addr %s238, 8
        %s240 = scalar_lea.vmem %s1, %s239
        %p241 = pneg %p70
        %p242 = pneg %p67
        %s243 = smul.u32 8, %s23
        %p244 = scmp.lt.s32.totalorder %s243, 15
        %s245 = scalar_select %p244, %s243, 15
        %s246 = smul.addr %s245, 8
        %s247 = scalar_lea.vmem %s2, %s246
        %p248 = pneg %p96
        %p249 = pneg %p93
        %p250 = pneg %p122
        %p251 = pneg %p119
        %s252 = sand.u32 %s109, 1
        %s253 = scalar_lea.sflag [#allocation3], %s252
        %s254 = sand.u32 %s109, 1
        %s255 = smul.addr %s254, 16
        %s256 = scalar_lea.vmem [#allocation2], %s255
        %p257 = pneg %p148
        %p258 = pneg %p145
        %s259 = sand.u32 %s23, 1
        %s260 = scalar_lea.sflag [#allocation5], %s259
        %s261 = sand.u32 %s135, 1
        %s262 = smul.addr %s261, 16
        %s263 = scalar_lea.vmem [#allocation4], %s262
        %p264 = pneg %p174
        %p265 = pneg %p171
        %s266 = sand.u32 %s23, 1
        %s267 = scalar_lea.sflag [#allocation5], %s266
        %s268 = sand.u32 %s161, 1
        %s269 = smul.addr %s268, 16
        %s270 = scalar_lea.vmem [#allocation6], %s269
        %s271 = smul.u32 8, %s23
        %p272 = scmp.lt.s32.totalorder %s271, 15
        %s273 = scalar_select %p272, %s271, 15
        %s274 = smul.addr %s273, 2
        %s275 = smul.addr %s274, 4
        %s276 = scalar_lea.vmem %s0, %s275
        %s277 = smul.u32 8, %s23
        %s278 = smul.u32 8, %s23
        %p279 = scmp.lt.s32.totalorder %s278, 15
        %s280 = scalar_select %p279, %s278, 15
        %s281 = smul.addr %s280, 8
        %s282 = scalar_lea.vmem %s1, %s281
        %s283 = smul.u32 8, %s23
        %s284 = smul.u32 8, %s23
        %p285 = scmp.lt.s32.totalorder %s284, 15
        %s286 = scalar_select %p285, %s284, 15
        %s287 = smul.addr %s286, 8
        %s288 = scalar_lea.vmem %s2, %s287
        %s289 = smul.u32 8, %s23
        %v290 = vld [vmem:[%s276] sm:$0xff]
        %v291 = vld [vmem:[%s276 + $0x8] sm:$0xff]
        %v292 = vld [vmem:[%s276 + $0x10] sm:$0xff]
        %v293 = vld [vmem:[%s276 + $0x18] sm:$0xff]
        %v294 = vld [vmem:[%s276 + $0x20] sm:$0xff]
        %v295 = vld [vmem:[%s276 + $0x28] sm:$0xff]
        %v296 = vld [vmem:[%s276 + $0x30] sm:$0xff]
        %v297 = vld [vmem:[%s276 + $0x38] sm:$0xff]
        %v298 = vld [vmem:[%s282] sm:$0xff]
        %v299 = vld [vmem:[%s282 + $0x8] sm:$0xff]
        %v300 = vld [vmem:[%s282 + $0x10] sm:$0xff]
        %v301 = vld [vmem:[%s282 + $0x18] sm:$0xff]
        %v302 = vld [vmem:[%s282 + $0x20] sm:$0xff]
        %v303 = vld [vmem:[%s282 + $0x28] sm:$0xff]
        %v304 = vld [vmem:[%s282 + $0x30] sm:$0xff]
        %v305 = vld [vmem:[%s282 + $0x38] sm:$0xff]
        %v306 = vld [vmem:[%s288] sm:$0xff]
        %v307 = vld [vmem:[%s288 + $0x8] sm:$0xff]
        %v308 = vld [vmem:[%s288 + $0x10] sm:$0xff]
        %v309 = vld [vmem:[%s288 + $0x18] sm:$0xff]
        %v310 = vld [vmem:[%s288 + $0x20] sm:$0xff]
        %v311 = vld [vmem:[%s288 + $0x28] sm:$0xff]
        %v312 = vld [vmem:[%s288 + $0x30] sm:$0xff]
        %v313 = vld [vmem:[%s288 + $0x38] sm:$0xff]
        %315 = vset.pattern.permute.xlu0 2
        %316 = vperm.xlu0 %315, %v298
        %v317 = vpop.permute.xlu0 %316
        %320 = vset.pattern.permute.xlu0 2
        %321 = vperm.xlu0 %320, %v299
        %v322 = vpop.permute.xlu0 %321
        %325 = vset.pattern.permute.xlu0 2
        %326 = vperm.xlu0 %325, %v300
        %v327 = vpop.permute.xlu0 %326
        %330 = vset.pattern.permute.xlu0 2
        %331 = vperm.xlu0 %330, %v301
        %v332 = vpop.permute.xlu0 %331
        %335 = vset.pattern.permute.xlu0 2
        %336 = vperm.xlu0 %335, %v302
        %v337 = vpop.permute.xlu0 %336
        %340 = vset.pattern.permute.xlu0 2
        %341 = vperm.xlu0 %340, %v303
        %v342 = vpop.permute.xlu0 %341
        %345 = vset.pattern.permute.xlu0 2
        %346 = vperm.xlu0 %345, %v304
        %v347 = vpop.permute.xlu0 %346
        %350 = vset.pattern.permute.xlu0 2
        %351 = vperm.xlu0 %350, %v305
        %v352 = vpop.permute.xlu0 %351
        %v362 = vlaneseq
        %v363 = vshrl.u32 %v362, 7
        %v364 = vsub.s32 2, %v363
        %v365 = vrot.slane %v290, %v364
        %v366 = vlaneseq
        %v367 = vshrl.u32 %v366, 7
        %v368 = vsub.s32 6, %v367
        %v369 = vrot.slane %v290, %v368
        %v370 = vlaneseq
        %v371 = vshrl.u32 %v370, 7
        %v372 = vsub.s32 2, %v371
        %v373 = vrot.slane %v291, %v372
        %v374 = vlaneseq
        %v375 = vshrl.u32 %v374, 7
        %v376 = vsub.s32 6, %v375
        %v377 = vrot.slane %v291, %v376
        %v378 = vlaneseq
        %v379 = vshrl.u32 %v378, 7
        %v380 = vsub.s32 2, %v379
        %v381 = vrot.slane %v292, %v380
        %v382 = vlaneseq
        %v383 = vshrl.u32 %v382, 7
        %v384 = vsub.s32 6, %v383
        %v385 = vrot.slane %v292, %v384
        %v386 = vlaneseq
        %v387 = vshrl.u32 %v386, 7
        %v388 = vsub.s32 2, %v387
        %v389 = vrot.slane %v293, %v388
        %v390 = vlaneseq
        %v391 = vshrl.u32 %v390, 7
        %v392 = vsub.s32 6, %v391
        %v393 = vrot.slane %v293, %v392
        %v394 = vlaneseq
        %v395 = vshrl.u32 %v394, 7
        %v396 = vsub.s32 2, %v395
        %v397 = vrot.slane %v294, %v396
        %v398 = vlaneseq
        %v399 = vshrl.u32 %v398, 7
        %v400 = vsub.s32 6, %v399
        %v401 = vrot.slane %v294, %v400
        %v402 = vlaneseq
        %v403 = vshrl.u32 %v402, 7
        %v404 = vsub.s32 2, %v403
        %v405 = vrot.slane %v295, %v404
        %v406 = vlaneseq
        %v407 = vshrl.u32 %v406, 7
        %v408 = vsub.s32 6, %v407
        %v409 = vrot.slane %v295, %v408
        %v410 = vlaneseq
        %v411 = vshrl.u32 %v410, 7
        %v412 = vsub.s32 2, %v411
        %v413 = vrot.slane %v296, %v412
        %v414 = vlaneseq
        %v415 = vshrl.u32 %v414, 7
        %v416 = vsub.s32 6, %v415
        %v417 = vrot.slane %v296, %v416
        %v418 = vlaneseq
        %v419 = vshrl.u32 %v418, 7
        %v420 = vsub.s32 2, %v419
        %v421 = vrot.slane %v297, %v420
        %v422 = vlaneseq
        %v423 = vshrl.u32 %v422, 7
        %v424 = vsub.s32 6, %v423
        %v425 = vrot.slane %v297, %v424
        %v442 = vlaneseq
        %v443 = vshrl.u32 %v442, 7
        %v444 = vsub.s32 2, %v443
        %v445 = vrot.slane %v365, %v444
        %v446 = vlaneseq
        %v447 = vshrl.u32 %v446, 7
        %v448 = vsub.s32 2, %v447
        %v449 = vrot.slane %v369, %v448
        %v450 = vlaneseq
        %v451 = vshrl.u32 %v450, 7
        %v452 = vsub.s32 2, %v451
        %v453 = vrot.slane %v373, %v452
        %v454 = vlaneseq
        %v455 = vshrl.u32 %v454, 7
        %v456 = vsub.s32 2, %v455
        %v457 = vrot.slane %v377, %v456
        %v458 = vlaneseq
        %v459 = vshrl.u32 %v458, 7
        %v460 = vsub.s32 2, %v459
        %v461 = vrot.slane %v381, %v460
        %v462 = vlaneseq
        %v463 = vshrl.u32 %v462, 7
        %v464 = vsub.s32 2, %v463
        %v465 = vrot.slane %v385, %v464
        %v466 = vlaneseq
        %v467 = vshrl.u32 %v466, 7
        %v468 = vsub.s32 2, %v467
        %v469 = vrot.slane %v389, %v468
        %v470 = vlaneseq
        %v471 = vshrl.u32 %v470, 7
        %v472 = vsub.s32 2, %v471
        %v473 = vrot.slane %v393, %v472
        %v474 = vlaneseq
        %v475 = vshrl.u32 %v474, 7
        %v476 = vsub.s32 2, %v475
        %v477 = vrot.slane %v397, %v476
        %v478 = vlaneseq
        %v479 = vshrl.u32 %v478, 7
        %v480 = vsub.s32 2, %v479
        %v481 = vrot.slane %v401, %v480
        %v482 = vlaneseq
        %v483 = vshrl.u32 %v482, 7
        %v484 = vsub.s32 2, %v483
        %v485 = vrot.slane %v405, %v484
        %v486 = vlaneseq
        %v487 = vshrl.u32 %v486, 7
        %v488 = vsub.s32 2, %v487
        %v489 = vrot.slane %v409, %v488
        %v490 = vlaneseq
        %v491 = vshrl.u32 %v490, 7
        %v492 = vsub.s32 2, %v491
        %v493 = vrot.slane %v413, %v492
        %v494 = vlaneseq
        %v495 = vshrl.u32 %v494, 7
        %v496 = vsub.s32 2, %v495
        %v497 = vrot.slane %v417, %v496
        %v498 = vlaneseq
        %v499 = vshrl.u32 %v498, 7
        %v500 = vsub.s32 2, %v499
        %v501 = vrot.slane %v421, %v500
        %v502 = vlaneseq
        %v503 = vshrl.u32 %v502, 7
        %v504 = vsub.s32 2, %v503
        %v505 = vrot.slane %v425, %v504
        %v506 = vmin.f32 %v317, %v445
        %v507 = vmin.f32 %v317, %v449
        %v508 = vmin.f32 %v322, %v453
        %v509 = vmin.f32 %v322, %v457
        %v510 = vmin.f32 %v327, %v461
        %v511 = vmin.f32 %v327, %v465
        %v512 = vmin.f32 %v332, %v469
        %v513 = vmin.f32 %v332, %v473
        %v514 = vmin.f32 %v337, %v477
        %v515 = vmin.f32 %v337, %v481
        %v516 = vmin.f32 %v342, %v485
        %v517 = vmin.f32 %v342, %v489
        %v518 = vmin.f32 %v347, %v493
        %v519 = vmin.f32 %v347, %v497
        %v520 = vmin.f32 %v352, %v501
        %v521 = vmin.f32 %v352, %v505
        %522 = vset.pattern.permute.xlu0 0
        %523 = vperm.xlu0 %522, %v298
        %v524 = vpop.permute.xlu0 %523
        %526 = vset.pattern.permute.xlu0 0
        %527 = vperm.xlu0 %526, %v299
        %v528 = vpop.permute.xlu0 %527
        %530 = vset.pattern.permute.xlu0 0
        %531 = vperm.xlu0 %530, %v300
        %v532 = vpop.permute.xlu0 %531
        %534 = vset.pattern.permute.xlu0 0
        %535 = vperm.xlu0 %534, %v301
        %v536 = vpop.permute.xlu0 %535
        %538 = vset.pattern.permute.xlu0 0
        %539 = vperm.xlu0 %538, %v302
        %v540 = vpop.permute.xlu0 %539
        %542 = vset.pattern.permute.xlu0 0
        %543 = vperm.xlu0 %542, %v303
        %v544 = vpop.permute.xlu0 %543
        %546 = vset.pattern.permute.xlu0 0
        %547 = vperm.xlu0 %546, %v304
        %v548 = vpop.permute.xlu0 %547
        %550 = vset.pattern.permute.xlu0 0
        %551 = vperm.xlu0 %550, %v305
        %v552 = vpop.permute.xlu0 %551
        %v554 = vlaneseq
        %v555 = vshrl.u32 %v554, 7
        %v556 = vsub.s32 0, %v555
        %v557 = vrot.slane %v290, %v556
        %v558 = vlaneseq
        %v559 = vshrl.u32 %v558, 7
        %v560 = vsub.s32 4, %v559
        %v561 = vrot.slane %v290, %v560
        %v562 = vlaneseq
        %v563 = vshrl.u32 %v562, 7
        %v564 = vsub.s32 0, %v563
        %v565 = vrot.slane %v291, %v564
        %v566 = vlaneseq
        %v567 = vshrl.u32 %v566, 7
        %v568 = vsub.s32 4, %v567
        %v569 = vrot.slane %v291, %v568
        %v570 = vlaneseq
        %v571 = vshrl.u32 %v570, 7
        %v572 = vsub.s32 0, %v571
        %v573 = vrot.slane %v292, %v572
        %v574 = vlaneseq
        %v575 = vshrl.u32 %v574, 7
        %v576 = vsub.s32 4, %v575
        %v577 = vrot.slane %v292, %v576
        %v578 = vlaneseq
        %v579 = vshrl.u32 %v578, 7
        %v580 = vsub.s32 0, %v579
        %v581 = vrot.slane %v293, %v580
        %v582 = vlaneseq
        %v583 = vshrl.u32 %v582, 7
        %v584 = vsub.s32 4, %v583
        %v585 = vrot.slane %v293, %v584
        %v586 = vlaneseq
        %v587 = vshrl.u32 %v586, 7
        %v588 = vsub.s32 0, %v587
        %v589 = vrot.slane %v294, %v588
        %v590 = vlaneseq
        %v591 = vshrl.u32 %v590, 7
        %v592 = vsub.s32 4, %v591
        %v593 = vrot.slane %v294, %v592
        %v594 = vlaneseq
        %v595 = vshrl.u32 %v594, 7
        %v596 = vsub.s32 0, %v595
        %v597 = vrot.slane %v295, %v596
        %v598 = vlaneseq
        %v599 = vshrl.u32 %v598, 7
        %v600 = vsub.s32 4, %v599
        %v601 = vrot.slane %v295, %v600
        %v602 = vlaneseq
        %v603 = vshrl.u32 %v602, 7
        %v604 = vsub.s32 0, %v603
        %v605 = vrot.slane %v296, %v604
        %v606 = vlaneseq
        %v607 = vshrl.u32 %v606, 7
        %v608 = vsub.s32 4, %v607
        %v609 = vrot.slane %v296, %v608
        %v610 = vlaneseq
        %v611 = vshrl.u32 %v610, 7
        %v612 = vsub.s32 0, %v611
        %v613 = vrot.slane %v297, %v612
        %v614 = vlaneseq
        %v615 = vshrl.u32 %v614, 7
        %v616 = vsub.s32 4, %v615
        %v617 = vrot.slane %v297, %v616
        %v634 = vlaneseq
        %v635 = vshrl.u32 %v634, 7
        %v636 = vsub.s32 0, %v635
        %v637 = vrot.slane %v557, %v636
        %v638 = vlaneseq
        %v639 = vshrl.u32 %v638, 7
        %v640 = vsub.s32 0, %v639
        %v641 = vrot.slane %v561, %v640
        %v642 = vlaneseq
        %v643 = vshrl.u32 %v642, 7
        %v644 = vsub.s32 0, %v643
        %v645 = vrot.slane %v565, %v644
        %v646 = vlaneseq
        %v647 = vshrl.u32 %v646, 7
        %v648 = vsub.s32 0, %v647
        %v649 = vrot.slane %v569, %v648
        %v650 = vlaneseq
        %v651 = vshrl.u32 %v650, 7
        %v652 = vsub.s32 0, %v651
        %v653 = vrot.slane %v573, %v652
        %v654 = vlaneseq
        %v655 = vshrl.u32 %v654, 7
        %v656 = vsub.s32 0, %v655
        %v657 = vrot.slane %v577, %v656
        %v658 = vlaneseq
        %v659 = vshrl.u32 %v658, 7
        %v660 = vsub.s32 0, %v659
        %v661 = vrot.slane %v581, %v660
        %v662 = vlaneseq
        %v663 = vshrl.u32 %v662, 7
        %v664 = vsub.s32 0, %v663
        %v665 = vrot.slane %v585, %v664
        %v666 = vlaneseq
        %v667 = vshrl.u32 %v666, 7
        %v668 = vsub.s32 0, %v667
        %v669 = vrot.slane %v589, %v668
        %v670 = vlaneseq
        %v671 = vshrl.u32 %v670, 7
        %v672 = vsub.s32 0, %v671
        %v673 = vrot.slane %v593, %v672
        %v674 = vlaneseq
        %v675 = vshrl.u32 %v674, 7
        %v676 = vsub.s32 0, %v675
        %v677 = vrot.slane %v597, %v676
        %v678 = vlaneseq
        %v679 = vshrl.u32 %v678, 7
        %v680 = vsub.s32 0, %v679
        %v681 = vrot.slane %v601, %v680
        %v682 = vlaneseq
        %v683 = vshrl.u32 %v682, 7
        %v684 = vsub.s32 0, %v683
        %v685 = vrot.slane %v605, %v684
        %v686 = vlaneseq
        %v687 = vshrl.u32 %v686, 7
        %v688 = vsub.s32 0, %v687
        %v689 = vrot.slane %v609, %v688
        %v690 = vlaneseq
        %v691 = vshrl.u32 %v690, 7
        %v692 = vsub.s32 0, %v691
        %v693 = vrot.slane %v613, %v692
        %v694 = vlaneseq
        %v695 = vshrl.u32 %v694, 7
        %v696 = vsub.s32 0, %v695
        %v697 = vrot.slane %v617, %v696
        %v698 = vmax.f32 %v524, %v637
        %v699 = vmax.f32 %v524, %v641
        %v700 = vmax.f32 %v528, %v645
        %v701 = vmax.f32 %v528, %v649
        %v702 = vmax.f32 %v532, %v653
        %v703 = vmax.f32 %v532, %v657
        %v704 = vmax.f32 %v536, %v661
        %v705 = vmax.f32 %v536, %v665
        %v706 = vmax.f32 %v540, %v669
        %v707 = vmax.f32 %v540, %v673
        %v708 = vmax.f32 %v544, %v677
        %v709 = vmax.f32 %v544, %v681
        %v710 = vmax.f32 %v548, %v685
        %v711 = vmax.f32 %v548, %v689
        %v712 = vmax.f32 %v552, %v693
        %v713 = vmax.f32 %v552, %v697
        %v714 = vsub.f32 %v506, %v698
        %v715 = vsub.f32 %v507, %v699
        %v716 = vsub.f32 %v508, %v700
        %v717 = vsub.f32 %v509, %v701
        %v718 = vsub.f32 %v510, %v702
        %v719 = vsub.f32 %v511, %v703
        %v720 = vsub.f32 %v512, %v704
        %v721 = vsub.f32 %v513, %v705
        %v722 = vsub.f32 %v514, %v706
        %v723 = vsub.f32 %v515, %v707
        %v724 = vsub.f32 %v516, %v708
        %v725 = vsub.f32 %v517, %v709
        %v726 = vsub.f32 %v518, %v710
        %v727 = vsub.f32 %v519, %v711
        %v728 = vsub.f32 %v520, %v712
        %v729 = vsub.f32 %v521, %v713
        %v730 = vmax.f32 %v714, 0.0
        %v731 = vmax.f32 %v715, 0.0
        %v732 = vmax.f32 %v716, 0.0
        %v733 = vmax.f32 %v717, 0.0
        %v734 = vmax.f32 %v718, 0.0
        %v735 = vmax.f32 %v719, 0.0
        %v736 = vmax.f32 %v720, 0.0
        %v737 = vmax.f32 %v721, 0.0
        %v738 = vmax.f32 %v722, 0.0
        %v739 = vmax.f32 %v723, 0.0
        %v740 = vmax.f32 %v724, 0.0
        %v741 = vmax.f32 %v725, 0.0
        %v742 = vmax.f32 %v726, 0.0
        %v743 = vmax.f32 %v727, 0.0
        %v744 = vmax.f32 %v728, 0.0
        %v745 = vmax.f32 %v729, 0.0
        %746 = vset.pattern.permute.xlu0 3
        %747 = vperm.xlu0 %746, %v298
        %v748 = vpop.permute.xlu0 %747
        %750 = vset.pattern.permute.xlu0 3
        %751 = vperm.xlu0 %750, %v299
        %v752 = vpop.permute.xlu0 %751
        %754 = vset.pattern.permute.xlu0 3
        %755 = vperm.xlu0 %754, %v300
        %v756 = vpop.permute.xlu0 %755
        %758 = vset.pattern.permute.xlu0 3
        %759 = vperm.xlu0 %758, %v301
        %v760 = vpop.permute.xlu0 %759
        %762 = vset.pattern.permute.xlu0 3
        %763 = vperm.xlu0 %762, %v302
        %v764 = vpop.permute.xlu0 %763
        %766 = vset.pattern.permute.xlu0 3
        %767 = vperm.xlu0 %766, %v303
        %v768 = vpop.permute.xlu0 %767
        %770 = vset.pattern.permute.xlu0 3
        %771 = vperm.xlu0 %770, %v304
        %v772 = vpop.permute.xlu0 %771
        %774 = vset.pattern.permute.xlu0 3
        %775 = vperm.xlu0 %774, %v305
        %v776 = vpop.permute.xlu0 %775
        %v778 = vlaneseq
        %v779 = vshrl.u32 %v778, 7
        %v780 = vsub.s32 3, %v779
        %v781 = vrot.slane %v290, %v780
        %v782 = vlaneseq
        %v783 = vshrl.u32 %v782, 7
        %v784 = vsub.s32 7, %v783
        %v785 = vrot.slane %v290, %v784
        %v786 = vlaneseq
        %v787 = vshrl.u32 %v786, 7
        %v788 = vsub.s32 3, %v787
        %v789 = vrot.slane %v291, %v788
        %v790 = vlaneseq
        %v791 = vshrl.u32 %v790, 7
        %v792 = vsub.s32 7, %v791
        %v793 = vrot.slane %v291, %v792
        %v794 = vlaneseq
        %v795 = vshrl.u32 %v794, 7
        %v796 = vsub.s32 3, %v795
        %v797 = vrot.slane %v292, %v796
        %v798 = vlaneseq
        %v799 = vshrl.u32 %v798, 7
        %v800 = vsub.s32 7, %v799
        %v801 = vrot.slane %v292, %v800
        %v802 = vlaneseq
        %v803 = vshrl.u32 %v802, 7
        %v804 = vsub.s32 3, %v803
        %v805 = vrot.slane %v293, %v804
        %v806 = vlaneseq
        %v807 = vshrl.u32 %v806, 7
        %v808 = vsub.s32 7, %v807
        %v809 = vrot.slane %v293, %v808
        %v810 = vlaneseq
        %v811 = vshrl.u32 %v810, 7
        %v812 = vsub.s32 3, %v811
        %v813 = vrot.slane %v294, %v812
        %v814 = vlaneseq
        %v815 = vshrl.u32 %v814, 7
        %v816 = vsub.s32 7, %v815
        %v817 = vrot.slane %v294, %v816
        %v818 = vlaneseq
        %v819 = vshrl.u32 %v818, 7
        %v820 = vsub.s32 3, %v819
        %v821 = vrot.slane %v295, %v820
        %v822 = vlaneseq
        %v823 = vshrl.u32 %v822, 7
        %v824 = vsub.s32 7, %v823
        %v825 = vrot.slane %v295, %v824
        %v826 = vlaneseq
        %v827 = vshrl.u32 %v826, 7
        %v828 = vsub.s32 3, %v827
        %v829 = vrot.slane %v296, %v828
        %v830 = vlaneseq
        %v831 = vshrl.u32 %v830, 7
        %v832 = vsub.s32 7, %v831
        %v833 = vrot.slane %v296, %v832
        %v834 = vlaneseq
        %v835 = vshrl.u32 %v834, 7
        %v836 = vsub.s32 3, %v835
        %v837 = vrot.slane %v297, %v836
        %v838 = vlaneseq
        %v839 = vshrl.u32 %v838, 7
        %v840 = vsub.s32 7, %v839
        %v841 = vrot.slane %v297, %v840
        %v858 = vlaneseq
        %v859 = vshrl.u32 %v858, 7
        %v860 = vsub.s32 3, %v859
        %v861 = vrot.slane %v781, %v860
        %v862 = vlaneseq
        %v863 = vshrl.u32 %v862, 7
        %v864 = vsub.s32 3, %v863
        %v865 = vrot.slane %v785, %v864
        %v866 = vlaneseq
        %v867 = vshrl.u32 %v866, 7
        %v868 = vsub.s32 3, %v867
        %v869 = vrot.slane %v789, %v868
        %v870 = vlaneseq
        %v871 = vshrl.u32 %v870, 7
        %v872 = vsub.s32 3, %v871
        %v873 = vrot.slane %v793, %v872
        %v874 = vlaneseq
        %v875 = vshrl.u32 %v874, 7
        %v876 = vsub.s32 3, %v875
        %v877 = vrot.slane %v797, %v876
        %v878 = vlaneseq
        %v879 = vshrl.u32 %v878, 7
        %v880 = vsub.s32 3, %v879
        %v881 = vrot.slane %v801, %v880
        %v882 = vlaneseq
        %v883 = vshrl.u32 %v882, 7
        %v884 = vsub.s32 3, %v883
        %v885 = vrot.slane %v805, %v884
        %v886 = vlaneseq
        %v887 = vshrl.u32 %v886, 7
        %v888 = vsub.s32 3, %v887
        %v889 = vrot.slane %v809, %v888
        %v890 = vlaneseq
        %v891 = vshrl.u32 %v890, 7
        %v892 = vsub.s32 3, %v891
        %v893 = vrot.slane %v813, %v892
        %v894 = vlaneseq
        %v895 = vshrl.u32 %v894, 7
        %v896 = vsub.s32 3, %v895
        %v897 = vrot.slane %v817, %v896
        %v898 = vlaneseq
        %v899 = vshrl.u32 %v898, 7
        %v900 = vsub.s32 3, %v899
        %v901 = vrot.slane %v821, %v900
        %v902 = vlaneseq
        %v903 = vshrl.u32 %v902, 7
        %v904 = vsub.s32 3, %v903
        %v905 = vrot.slane %v825, %v904
        %v906 = vlaneseq
        %v907 = vshrl.u32 %v906, 7
        %v908 = vsub.s32 3, %v907
        %v909 = vrot.slane %v829, %v908
        %v910 = vlaneseq
        %v911 = vshrl.u32 %v910, 7
        %v912 = vsub.s32 3, %v911
        %v913 = vrot.slane %v833, %v912
        %v914 = vlaneseq
        %v915 = vshrl.u32 %v914, 7
        %v916 = vsub.s32 3, %v915
        %v917 = vrot.slane %v837, %v916
        %v918 = vlaneseq
        %v919 = vshrl.u32 %v918, 7
        %v920 = vsub.s32 3, %v919
        %v921 = vrot.slane %v841, %v920
        %v922 = vmin.f32 %v748, %v861
        %v923 = vmin.f32 %v748, %v865
        %v924 = vmin.f32 %v752, %v869
        %v925 = vmin.f32 %v752, %v873
        %v926 = vmin.f32 %v756, %v877
        %v927 = vmin.f32 %v756, %v881
        %v928 = vmin.f32 %v760, %v885
        %v929 = vmin.f32 %v760, %v889
        %v930 = vmin.f32 %v764, %v893
        %v931 = vmin.f32 %v764, %v897
        %v932 = vmin.f32 %v768, %v901
        %v933 = vmin.f32 %v768, %v905
        %v934 = vmin.f32 %v772, %v909
        %v935 = vmin.f32 %v772, %v913
        %v936 = vmin.f32 %v776, %v917
        %v937 = vmin.f32 %v776, %v921
        %938 = vset.pattern.permute.xlu0 1
        %939 = vperm.xlu0 %938, %v298
        %v940 = vpop.permute.xlu0 %939
        %942 = vset.pattern.permute.xlu0 1
        %943 = vperm.xlu0 %942, %v299
        %v944 = vpop.permute.xlu0 %943
        %946 = vset.pattern.permute.xlu0 1
        %947 = vperm.xlu0 %946, %v300
        %v948 = vpop.permute.xlu0 %947
        %950 = vset.pattern.permute.xlu0 1
        %951 = vperm.xlu0 %950, %v301
        %v952 = vpop.permute.xlu0 %951
        %954 = vset.pattern.permute.xlu0 1
        %955 = vperm.xlu0 %954, %v302
        %v956 = vpop.permute.xlu0 %955
        %958 = vset.pattern.permute.xlu0 1
        %959 = vperm.xlu0 %958, %v303
        %v960 = vpop.permute.xlu0 %959
        %962 = vset.pattern.permute.xlu0 1
        %963 = vperm.xlu0 %962, %v304
        %v964 = vpop.permute.xlu0 %963
        %966 = vset.pattern.permute.xlu0 1
        %967 = vperm.xlu0 %966, %v305
        %v968 = vpop.permute.xlu0 %967
        %v970 = vlaneseq
        %v971 = vshrl.u32 %v970, 7
        %v972 = vsub.s32 1, %v971
        %v973 = vrot.slane %v290, %v972
        %v974 = vlaneseq
        %v975 = vshrl.u32 %v974, 7
        %v976 = vsub.s32 5, %v975
        %v977 = vrot.slane %v290, %v976
        %v978 = vlaneseq
        %v979 = vshrl.u32 %v978, 7
        %v980 = vsub.s32 1, %v979
        %v981 = vrot.slane %v291, %v980
        %v982 = vlaneseq
        %v983 = vshrl.u32 %v982, 7
        %v984 = vsub.s32 5, %v983
        %v985 = vrot.slane %v291, %v984
        %v986 = vlaneseq
        %v987 = vshrl.u32 %v986, 7
        %v988 = vsub.s32 1, %v987
        %v989 = vrot.slane %v292, %v988
        %v990 = vlaneseq
        %v991 = vshrl.u32 %v990, 7
        %v992 = vsub.s32 5, %v991
        %v993 = vrot.slane %v292, %v992
        %v994 = vlaneseq
        %v995 = vshrl.u32 %v994, 7
        %v996 = vsub.s32 1, %v995
        %v997 = vrot.slane %v293, %v996
        %v998 = vlaneseq
        %v999 = vshrl.u32 %v998, 7
        %v1000 = vsub.s32 5, %v999
        %v1001 = vrot.slane %v293, %v1000
        %v1002 = vlaneseq
        %v1003 = vshrl.u32 %v1002, 7
        %v1004 = vsub.s32 1, %v1003
        %v1005 = vrot.slane %v294, %v1004
        %v1006 = vlaneseq
        %v1007 = vshrl.u32 %v1006, 7
        %v1008 = vsub.s32 5, %v1007
        %v1009 = vrot.slane %v294, %v1008
        %v1010 = vlaneseq
        %v1011 = vshrl.u32 %v1010, 7
        %v1012 = vsub.s32 1, %v1011
        %v1013 = vrot.slane %v295, %v1012
        %v1014 = vlaneseq
        %v1015 = vshrl.u32 %v1014, 7
        %v1016 = vsub.s32 5, %v1015
        %v1017 = vrot.slane %v295, %v1016
        %v1018 = vlaneseq
        %v1019 = vshrl.u32 %v1018, 7
        %v1020 = vsub.s32 1, %v1019
        %v1021 = vrot.slane %v296, %v1020
        %v1022 = vlaneseq
        %v1023 = vshrl.u32 %v1022, 7
        %v1024 = vsub.s32 5, %v1023
        %v1025 = vrot.slane %v296, %v1024
        %v1026 = vlaneseq
        %v1027 = vshrl.u32 %v1026, 7
        %v1028 = vsub.s32 1, %v1027
        %v1029 = vrot.slane %v297, %v1028
        %v1030 = vlaneseq
        %v1031 = vshrl.u32 %v1030, 7
        %v1032 = vsub.s32 5, %v1031
        %v1033 = vrot.slane %v297, %v1032
        %v1050 = vlaneseq
        %v1051 = vshrl.u32 %v1050, 7
        %v1052 = vsub.s32 1, %v1051
        %v1053 = vrot.slane %v973, %v1052
        %v1054 = vlaneseq
        %v1055 = vshrl.u32 %v1054, 7
        %v1056 = vsub.s32 1, %v1055
        %v1057 = vrot.slane %v977, %v1056
        %v1058 = vlaneseq
        %v1059 = vshrl.u32 %v1058, 7
        %v1060 = vsub.s32 1, %v1059
        %v1061 = vrot.slane %v981, %v1060
        %v1062 = vlaneseq
        %v1063 = vshrl.u32 %v1062, 7
        %v1064 = vsub.s32 1, %v1063
        %v1065 = vrot.slane %v985, %v1064
        %v1066 = vlaneseq
        %v1067 = vshrl.u32 %v1066, 7
        %v1068 = vsub.s32 1, %v1067
        %v1069 = vrot.slane %v989, %v1068
        %v1070 = vlaneseq
        %v1071 = vshrl.u32 %v1070, 7
        %v1072 = vsub.s32 1, %v1071
        %v1073 = vrot.slane %v993, %v1072
        %v1074 = vlaneseq
        %v1075 = vshrl.u32 %v1074, 7
        %v1076 = vsub.s32 1, %v1075
        %v1077 = vrot.slane %v997, %v1076
        %v1078 = vlaneseq
        %v1079 = vshrl.u32 %v1078, 7
        %v1080 = vsub.s32 1, %v1079
        %v1081 = vrot.slane %v1001, %v1080
        %v1082 = vlaneseq
        %v1083 = vshrl.u32 %v1082, 7
        %v1084 = vsub.s32 1, %v1083
        %v1085 = vrot.slane %v1005, %v1084
        %v1086 = vlaneseq
        %v1087 = vshrl.u32 %v1086, 7
        %v1088 = vsub.s32 1, %v1087
        %v1089 = vrot.slane %v1009, %v1088
        %v1090 = vlaneseq
        %v1091 = vshrl.u32 %v1090, 7
        %v1092 = vsub.s32 1, %v1091
        %v1093 = vrot.slane %v1013, %v1092
        %v1094 = vlaneseq
        %v1095 = vshrl.u32 %v1094, 7
        %v1096 = vsub.s32 1, %v1095
        %v1097 = vrot.slane %v1017, %v1096
        %v1098 = vlaneseq
        %v1099 = vshrl.u32 %v1098, 7
        %v1100 = vsub.s32 1, %v1099
        %v1101 = vrot.slane %v1021, %v1100
        %v1102 = vlaneseq
        %v1103 = vshrl.u32 %v1102, 7
        %v1104 = vsub.s32 1, %v1103
        %v1105 = vrot.slane %v1025, %v1104
        %v1106 = vlaneseq
        %v1107 = vshrl.u32 %v1106, 7
        %v1108 = vsub.s32 1, %v1107
        %v1109 = vrot.slane %v1029, %v1108
        %v1110 = vlaneseq
        %v1111 = vshrl.u32 %v1110, 7
        %v1112 = vsub.s32 1, %v1111
        %v1113 = vrot.slane %v1033, %v1112
        %v1114 = vmax.f32 %v940, %v1053
        %v1115 = vmax.f32 %v940, %v1057
        %v1116 = vmax.f32 %v944, %v1061
        %v1117 = vmax.f32 %v944, %v1065
        %v1118 = vmax.f32 %v948, %v1069
        %v1119 = vmax.f32 %v948, %v1073
        %v1120 = vmax.f32 %v952, %v1077
        %v1121 = vmax.f32 %v952, %v1081
        %v1122 = vmax.f32 %v956, %v1085
        %v1123 = vmax.f32 %v956, %v1089
        %v1124 = vmax.f32 %v960, %v1093
        %v1125 = vmax.f32 %v960, %v1097
        %v1126 = vmax.f32 %v964, %v1101
        %v1127 = vmax.f32 %v964, %v1105
        %v1128 = vmax.f32 %v968, %v1109
        %v1129 = vmax.f32 %v968, %v1113
        %v1130 = vsub.f32 %v922, %v1114
        %v1131 = vsub.f32 %v923, %v1115
        %v1132 = vsub.f32 %v924, %v1116
        %v1133 = vsub.f32 %v925, %v1117
        %v1134 = vsub.f32 %v926, %v1118
        %v1135 = vsub.f32 %v927, %v1119
        %v1136 = vsub.f32 %v928, %v1120
        %v1137 = vsub.f32 %v929, %v1121
        %v1138 = vsub.f32 %v930, %v1122
        %v1139 = vsub.f32 %v931, %v1123
        %v1140 = vsub.f32 %v932, %v1124
        %v1141 = vsub.f32 %v933, %v1125
        %v1142 = vsub.f32 %v934, %v1126
        %v1143 = vsub.f32 %v935, %v1127
        %v1144 = vsub.f32 %v936, %v1128
        %v1145 = vsub.f32 %v937, %v1129
        %v1146 = vmax.f32 %v1130, 0.0
        %v1147 = vmax.f32 %v1131, 0.0
        %v1148 = vmax.f32 %v1132, 0.0
        %v1149 = vmax.f32 %v1133, 0.0
        %v1150 = vmax.f32 %v1134, 0.0
        %v1151 = vmax.f32 %v1135, 0.0
        %v1152 = vmax.f32 %v1136, 0.0
        %v1153 = vmax.f32 %v1137, 0.0
        %v1154 = vmax.f32 %v1138, 0.0
        %v1155 = vmax.f32 %v1139, 0.0
        %v1156 = vmax.f32 %v1140, 0.0
        %v1157 = vmax.f32 %v1141, 0.0
        %v1158 = vmax.f32 %v1142, 0.0
        %v1159 = vmax.f32 %v1143, 0.0
        %v1160 = vmax.f32 %v1144, 0.0
        %v1161 = vmax.f32 %v1145, 0.0
        %v1162 = vmul.f32 %v730, %v1146
        %v1163 = vmul.f32 %v731, %v1147
        %v1164 = vmul.f32 %v732, %v1148
        %v1165 = vmul.f32 %v733, %v1149
        %v1166 = vmul.f32 %v734, %v1150
        %v1167 = vmul.f32 %v735, %v1151
        %v1168 = vmul.f32 %v736, %v1152
        %v1169 = vmul.f32 %v737, %v1153
        %v1170 = vmul.f32 %v738, %v1154
        %v1171 = vmul.f32 %v739, %v1155
        %v1172 = vmul.f32 %v740, %v1156
        %v1173 = vmul.f32 %v741, %v1157
        %v1174 = vmul.f32 %v742, %v1158
        %v1175 = vmul.f32 %v743, %v1159
        %v1176 = vmul.f32 %v744, %v1160
        %v1177 = vmul.f32 %v745, %v1161
        %v1178 = vrot.slane %v290, 6
        %v1179 = vrot.slane %v291, 6
        %v1180 = vrot.slane %v292, 6
        %v1181 = vrot.slane %v293, 6
        %v1182 = vrot.slane %v294, 6
        %v1183 = vrot.slane %v295, 6
        %v1184 = vrot.slane %v296, 6
        %v1185 = vrot.slane %v297, 6
        %v1194 = vsub.f32 %v290, %v1178
        %v1195 = vsub.f32 %v291, %v1179
        %v1196 = vsub.f32 %v292, %v1180
        %v1197 = vsub.f32 %v293, %v1181
        %v1198 = vsub.f32 %v294, %v1182
        %v1199 = vsub.f32 %v295, %v1183
        %v1200 = vsub.f32 %v296, %v1184
        %v1201 = vsub.f32 %v297, %v1185
        %v1210 = vrot.slane %v1194, 5
        %v1211 = vrot.slane %v1210, 4
        %v1212 = vrot.slane %v1195, 5
        %v1213 = vrot.slane %v1212, 4
        %v1214 = vrot.slane %v1196, 5
        %v1215 = vrot.slane %v1214, 4
        %v1216 = vrot.slane %v1197, 5
        %v1217 = vrot.slane %v1216, 4
        %v1218 = vrot.slane %v1198, 5
        %v1219 = vrot.slane %v1218, 4
        %v1220 = vrot.slane %v1199, 5
        %v1221 = vrot.slane %v1220, 4
        %v1222 = vrot.slane %v1200, 5
        %v1223 = vrot.slane %v1222, 4
        %v1224 = vrot.slane %v1201, 5
        %v1225 = vrot.slane %v1224, 4
        %v1234 = vmul.f32 %v1194, %v1211
        %v1235 = vmul.f32 %v1195, %v1213
        %v1236 = vmul.f32 %v1196, %v1215
        %v1237 = vmul.f32 %v1197, %v1217
        %v1238 = vmul.f32 %v1198, %v1219
        %v1239 = vmul.f32 %v1199, %v1221
        %v1240 = vmul.f32 %v1200, %v1223
        %v1241 = vmul.f32 %v1201, %v1225
        %1242 = vrot.lane.b32.xlu0 %v298, 2
        %v1243 = vpop.permute.xlu0 %1242
        %1244 = vrot.lane.b32.xlu0 %v299, 2
        %v1245 = vpop.permute.xlu0 %1244
        %1246 = vrot.lane.b32.xlu0 %v300, 2
        %v1247 = vpop.permute.xlu0 %1246
        %1248 = vrot.lane.b32.xlu0 %v301, 2
        %v1249 = vpop.permute.xlu0 %1248
        %1250 = vrot.lane.b32.xlu0 %v302, 2
        %v1251 = vpop.permute.xlu0 %1250
        %1252 = vrot.lane.b32.xlu0 %v303, 2
        %v1253 = vpop.permute.xlu0 %1252
        %1254 = vrot.lane.b32.xlu0 %v304, 2
        %v1255 = vpop.permute.xlu0 %1254
        %1256 = vrot.lane.b32.xlu0 %v305, 2
        %v1257 = vpop.permute.xlu0 %1256
        %v1266 = vsub.f32 %v298, %v1243
        %v1267 = vsub.f32 %v299, %v1245
        %v1268 = vsub.f32 %v300, %v1247
        %v1269 = vsub.f32 %v301, %v1249
        %v1270 = vsub.f32 %v302, %v1251
        %v1271 = vsub.f32 %v303, %v1253
        %v1272 = vsub.f32 %v304, %v1255
        %v1273 = vsub.f32 %v305, %v1257
        %1282 = vrot.lane.b32.xlu0 %v1266, 127
        %v1283 = vpop.permute.xlu0 %1282
        %1284 = vrot.lane.b32.xlu0 %v1267, 127
        %v1285 = vpop.permute.xlu0 %1284
        %1286 = vrot.lane.b32.xlu0 %v1268, 127
        %v1287 = vpop.permute.xlu0 %1286
        %1288 = vrot.lane.b32.xlu0 %v1269, 127
        %v1289 = vpop.permute.xlu0 %1288
        %1290 = vrot.lane.b32.xlu0 %v1270, 127
        %v1291 = vpop.permute.xlu0 %1290
        %1292 = vrot.lane.b32.xlu0 %v1271, 127
        %v1293 = vpop.permute.xlu0 %1292
        %1294 = vrot.lane.b32.xlu0 %v1272, 127
        %v1295 = vpop.permute.xlu0 %1294
        %1296 = vrot.lane.b32.xlu0 %v1273, 127
        %v1297 = vpop.permute.xlu0 %1296
        %v1306 = vmul.f32 %v1266, %v1283
        %v1307 = vmul.f32 %v1267, %v1285
        %v1308 = vmul.f32 %v1268, %v1287
        %v1309 = vmul.f32 %v1269, %v1289
        %v1310 = vmul.f32 %v1270, %v1291
        %v1311 = vmul.f32 %v1271, %v1293
        %v1312 = vmul.f32 %v1272, %v1295
        %v1313 = vmul.f32 %v1273, %v1297
        %v1322 = vlaneseq
        %v1323 = vshrl.u32 %v1322, 7
        %v1324 = vsub.s32 2, %v1323
        %v1325 = vrot.slane %v1234, %v1324
        %v1326 = vlaneseq
        %v1327 = vshrl.u32 %v1326, 7
        %v1328 = vsub.s32 6, %v1327
        %v1329 = vrot.slane %v1234, %v1328
        %v1330 = vlaneseq
        %v1331 = vshrl.u32 %v1330, 7
        %v1332 = vsub.s32 2, %v1331
        %v1333 = vrot.slane %v1235, %v1332
        %v1334 = vlaneseq
        %v1335 = vshrl.u32 %v1334, 7
        %v1336 = vsub.s32 6, %v1335
        %v1337 = vrot.slane %v1235, %v1336
        %v1338 = vlaneseq
        %v1339 = vshrl.u32 %v1338, 7
        %v1340 = vsub.s32 2, %v1339
        %v1341 = vrot.slane %v1236, %v1340
        %v1342 = vlaneseq
        %v1343 = vshrl.u32 %v1342, 7
        %v1344 = vsub.s32 6, %v1343
        %v1345 = vrot.slane %v1236, %v1344
        %v1346 = vlaneseq
        %v1347 = vshrl.u32 %v1346, 7
        %v1348 = vsub.s32 2, %v1347
        %v1349 = vrot.slane %v1237, %v1348
        %v1350 = vlaneseq
        %v1351 = vshrl.u32 %v1350, 7
        %v1352 = vsub.s32 6, %v1351
        %v1353 = vrot.slane %v1237, %v1352
        %v1354 = vlaneseq
        %v1355 = vshrl.u32 %v1354, 7
        %v1356 = vsub.s32 2, %v1355
        %v1357 = vrot.slane %v1238, %v1356
        %v1358 = vlaneseq
        %v1359 = vshrl.u32 %v1358, 7
        %v1360 = vsub.s32 6, %v1359
        %v1361 = vrot.slane %v1238, %v1360
        %v1362 = vlaneseq
        %v1363 = vshrl.u32 %v1362, 7
        %v1364 = vsub.s32 2, %v1363
        %v1365 = vrot.slane %v1239, %v1364
        %v1366 = vlaneseq
        %v1367 = vshrl.u32 %v1366, 7
        %v1368 = vsub.s32 6, %v1367
        %v1369 = vrot.slane %v1239, %v1368
        %v1370 = vlaneseq
        %v1371 = vshrl.u32 %v1370, 7
        %v1372 = vsub.s32 2, %v1371
        %v1373 = vrot.slane %v1240, %v1372
        %v1374 = vlaneseq
        %v1375 = vshrl.u32 %v1374, 7
        %v1376 = vsub.s32 6, %v1375
        %v1377 = vrot.slane %v1240, %v1376
        %v1378 = vlaneseq
        %v1379 = vshrl.u32 %v1378, 7
        %v1380 = vsub.s32 2, %v1379
        %v1381 = vrot.slane %v1241, %v1380
        %v1382 = vlaneseq
        %v1383 = vshrl.u32 %v1382, 7
        %v1384 = vsub.s32 6, %v1383
        %v1385 = vrot.slane %v1241, %v1384
        %v1402 = vlaneseq
        %v1403 = vshrl.u32 %v1402, 7
        %v1404 = vsub.s32 2, %v1403
        %v1405 = vrot.slane %v1325, %v1404
        %v1406 = vlaneseq
        %v1407 = vshrl.u32 %v1406, 7
        %v1408 = vsub.s32 2, %v1407
        %v1409 = vrot.slane %v1329, %v1408
        %v1410 = vlaneseq
        %v1411 = vshrl.u32 %v1410, 7
        %v1412 = vsub.s32 2, %v1411
        %v1413 = vrot.slane %v1333, %v1412
        %v1414 = vlaneseq
        %v1415 = vshrl.u32 %v1414, 7
        %v1416 = vsub.s32 2, %v1415
        %v1417 = vrot.slane %v1337, %v1416
        %v1418 = vlaneseq
        %v1419 = vshrl.u32 %v1418, 7
        %v1420 = vsub.s32 2, %v1419
        %v1421 = vrot.slane %v1341, %v1420
        %v1422 = vlaneseq
        %v1423 = vshrl.u32 %v1422, 7
        %v1424 = vsub.s32 2, %v1423
        %v1425 = vrot.slane %v1345, %v1424
        %v1426 = vlaneseq
        %v1427 = vshrl.u32 %v1426, 7
        %v1428 = vsub.s32 2, %v1427
        %v1429 = vrot.slane %v1349, %v1428
        %v1430 = vlaneseq
        %v1431 = vshrl.u32 %v1430, 7
        %v1432 = vsub.s32 2, %v1431
        %v1433 = vrot.slane %v1353, %v1432
        %v1434 = vlaneseq
        %v1435 = vshrl.u32 %v1434, 7
        %v1436 = vsub.s32 2, %v1435
        %v1437 = vrot.slane %v1357, %v1436
        %v1438 = vlaneseq
        %v1439 = vshrl.u32 %v1438, 7
        %v1440 = vsub.s32 2, %v1439
        %v1441 = vrot.slane %v1361, %v1440
        %v1442 = vlaneseq
        %v1443 = vshrl.u32 %v1442, 7
        %v1444 = vsub.s32 2, %v1443
        %v1445 = vrot.slane %v1365, %v1444
        %v1446 = vlaneseq
        %v1447 = vshrl.u32 %v1446, 7
        %v1448 = vsub.s32 2, %v1447
        %v1449 = vrot.slane %v1369, %v1448
        %v1450 = vlaneseq
        %v1451 = vshrl.u32 %v1450, 7
        %v1452 = vsub.s32 2, %v1451
        %v1453 = vrot.slane %v1373, %v1452
        %v1454 = vlaneseq
        %v1455 = vshrl.u32 %v1454, 7
        %v1456 = vsub.s32 2, %v1455
        %v1457 = vrot.slane %v1377, %v1456
        %v1458 = vlaneseq
        %v1459 = vshrl.u32 %v1458, 7
        %v1460 = vsub.s32 2, %v1459
        %v1461 = vrot.slane %v1381, %v1460
        %v1462 = vlaneseq
        %v1463 = vshrl.u32 %v1462, 7
        %v1464 = vsub.s32 2, %v1463
        %v1465 = vrot.slane %v1385, %v1464
        %1467 = vset.pattern.permute.xlu0 2
        %1468 = vperm.xlu0 %1467, %v1306
        %v1469 = vpop.permute.xlu0 %1468
        %1472 = vset.pattern.permute.xlu0 2
        %1473 = vperm.xlu0 %1472, %v1307
        %v1474 = vpop.permute.xlu0 %1473
        %1477 = vset.pattern.permute.xlu0 2
        %1478 = vperm.xlu0 %1477, %v1308
        %v1479 = vpop.permute.xlu0 %1478
        %1482 = vset.pattern.permute.xlu0 2
        %1483 = vperm.xlu0 %1482, %v1309
        %v1484 = vpop.permute.xlu0 %1483
        %1487 = vset.pattern.permute.xlu0 2
        %1488 = vperm.xlu0 %1487, %v1310
        %v1489 = vpop.permute.xlu0 %1488
        %1492 = vset.pattern.permute.xlu0 2
        %1493 = vperm.xlu0 %1492, %v1311
        %v1494 = vpop.permute.xlu0 %1493
        %1497 = vset.pattern.permute.xlu0 2
        %1498 = vperm.xlu0 %1497, %v1312
        %v1499 = vpop.permute.xlu0 %1498
        %1502 = vset.pattern.permute.xlu0 2
        %1503 = vperm.xlu0 %1502, %v1313
        %v1504 = vpop.permute.xlu0 %1503
        %v1506 = vadd.f32 %v1405, %v1469
        %v1507 = vadd.f32 %v1409, %v1469
        %v1508 = vadd.f32 %v1413, %v1474
        %v1509 = vadd.f32 %v1417, %v1474
        %v1510 = vadd.f32 %v1421, %v1479
        %v1511 = vadd.f32 %v1425, %v1479
        %v1512 = vadd.f32 %v1429, %v1484
        %v1513 = vadd.f32 %v1433, %v1484
        %v1514 = vadd.f32 %v1437, %v1489
        %v1515 = vadd.f32 %v1441, %v1489
        %v1516 = vadd.f32 %v1445, %v1494
        %v1517 = vadd.f32 %v1449, %v1494
        %v1518 = vadd.f32 %v1453, %v1499
        %v1519 = vadd.f32 %v1457, %v1499
        %v1520 = vadd.f32 %v1461, %v1504
        %v1521 = vadd.f32 %v1465, %v1504
        %v1522 = vsub.f32 %v1506, %v1162
        %v1523 = vsub.f32 %v1507, %v1163
        %v1524 = vsub.f32 %v1508, %v1164
        %v1525 = vsub.f32 %v1509, %v1165
        %v1526 = vsub.f32 %v1510, %v1166
        %v1527 = vsub.f32 %v1511, %v1167
        %v1528 = vsub.f32 %v1512, %v1168
        %v1529 = vsub.f32 %v1513, %v1169
        %v1530 = vsub.f32 %v1514, %v1170
        %v1531 = vsub.f32 %v1515, %v1171
        %v1532 = vsub.f32 %v1516, %v1172
        %v1533 = vsub.f32 %v1517, %v1173
        %v1534 = vsub.f32 %v1518, %v1174
        %v1535 = vsub.f32 %v1519, %v1175
        %v1536 = vsub.f32 %v1520, %v1176
        %v1537 = vsub.f32 %v1521, %v1177
        %vm1538 = vcmp.gt.f32.partialorder %v1162, 0.0
        %vm1539 = vcmp.gt.f32.partialorder %v1163, 0.0
        %vm1540 = vcmp.gt.f32.partialorder %v1164, 0.0
        %vm1541 = vcmp.gt.f32.partialorder %v1165, 0.0
        %vm1542 = vcmp.gt.f32.partialorder %v1166, 0.0
        %vm1543 = vcmp.gt.f32.partialorder %v1167, 0.0
        %vm1544 = vcmp.gt.f32.partialorder %v1168, 0.0
        %vm1545 = vcmp.gt.f32.partialorder %v1169, 0.0
        %vm1546 = vcmp.gt.f32.partialorder %v1170, 0.0
        %vm1547 = vcmp.gt.f32.partialorder %v1171, 0.0
        %vm1548 = vcmp.gt.f32.partialorder %v1172, 0.0
        %vm1549 = vcmp.gt.f32.partialorder %v1173, 0.0
        %vm1550 = vcmp.gt.f32.partialorder %v1174, 0.0
        %vm1551 = vcmp.gt.f32.partialorder %v1175, 0.0
        %vm1552 = vcmp.gt.f32.partialorder %v1176, 0.0
        %vm1553 = vcmp.gt.f32.partialorder %v1177, 0.0
        %v1554 = vrcp.pop %v1522
        %v1555 = vmul.f32 %v1162, %v1554
        %v1556 = vrcp.pop %v1523
        %v1557 = vmul.f32 %v1163, %v1556
        %v1558 = vrcp.pop %v1524
        %v1559 = vmul.f32 %v1164, %v1558
        %v1560 = vrcp.pop %v1525
        %v1561 = vmul.f32 %v1165, %v1560
        %v1562 = vrcp.pop %v1526
        %v1563 = vmul.f32 %v1166, %v1562
        %v1564 = vrcp.pop %v1527
        %v1565 = vmul.f32 %v1167, %v1564
        %v1566 = vrcp.pop %v1528
        %v1567 = vmul.f32 %v1168, %v1566
        %v1568 = vrcp.pop %v1529
        %v1569 = vmul.f32 %v1169, %v1568
        %v1570 = vrcp.pop %v1530
        %v1571 = vmul.f32 %v1170, %v1570
        %v1572 = vrcp.pop %v1531
        %v1573 = vmul.f32 %v1171, %v1572
        %v1574 = vrcp.pop %v1532
        %v1575 = vmul.f32 %v1172, %v1574
        %v1576 = vrcp.pop %v1533
        %v1577 = vmul.f32 %v1173, %v1576
        %v1578 = vrcp.pop %v1534
        %v1579 = vmul.f32 %v1174, %v1578
        %v1580 = vrcp.pop %v1535
        %v1581 = vmul.f32 %v1175, %v1580
        %v1582 = vrcp.pop %v1536
        %v1583 = vmul.f32 %v1176, %v1582
        %v1584 = vrcp.pop %v1537
        %v1585 = vmul.f32 %v1177, %v1584
        %v1586 = vsel %vm1538, %v1555, 0.0
        %v1587 = vsel %vm1539, %v1557, 0.0
        %v1588 = vsel %vm1540, %v1559, 0.0
        %v1589 = vsel %vm1541, %v1561, 0.0
        %v1590 = vsel %vm1542, %v1563, 0.0
        %v1591 = vsel %vm1543, %v1565, 0.0
        %v1592 = vsel %vm1544, %v1567, 0.0
        %v1593 = vsel %vm1545, %v1569, 0.0
        %v1594 = vsel %vm1546, %v1571, 0.0
        %v1595 = vsel %vm1547, %v1573, 0.0
        %v1596 = vsel %vm1548, %v1575, 0.0
        %v1597 = vsel %vm1549, %v1577, 0.0
        %v1598 = vsel %vm1550, %v1579, 0.0
        %v1599 = vsel %vm1551, %v1581, 0.0
        %v1600 = vsel %vm1552, %v1583, 0.0
        %v1601 = vsel %vm1553, %v1585, 0.0
        %v1602 = vrot.slane %v1586, 4
        %v1603 = vmax.f32 %v1586, %v1602
        %v1604 = vrot.slane %v1603, 2
        %v1605 = vmax.f32 %v1603, %v1604
        %v1606 = vrot.slane %v1605, 1
        %v1607 = vmax.f32 %v1605, %v1606
        %v1608 = vrot.slane %v1587, 4
        %v1609 = vmax.f32 %v1587, %v1608
        %v1610 = vrot.slane %v1609, 2
        %v1611 = vmax.f32 %v1609, %v1610
        %v1612 = vrot.slane %v1611, 1
        %v1613 = vmax.f32 %v1611, %v1612
        %v1614 = vrot.slane %v1588, 4
        %v1615 = vmax.f32 %v1588, %v1614
        %v1616 = vrot.slane %v1615, 2
        %v1617 = vmax.f32 %v1615, %v1616
        %v1618 = vrot.slane %v1617, 1
        %v1619 = vmax.f32 %v1617, %v1618
        %v1620 = vrot.slane %v1589, 4
        %v1621 = vmax.f32 %v1589, %v1620
        %v1622 = vrot.slane %v1621, 2
        %v1623 = vmax.f32 %v1621, %v1622
        %v1624 = vrot.slane %v1623, 1
        %v1625 = vmax.f32 %v1623, %v1624
        %v1626 = vrot.slane %v1590, 4
        %v1627 = vmax.f32 %v1590, %v1626
        %v1628 = vrot.slane %v1627, 2
        %v1629 = vmax.f32 %v1627, %v1628
        %v1630 = vrot.slane %v1629, 1
        %v1631 = vmax.f32 %v1629, %v1630
        %v1632 = vrot.slane %v1591, 4
        %v1633 = vmax.f32 %v1591, %v1632
        %v1634 = vrot.slane %v1633, 2
        %v1635 = vmax.f32 %v1633, %v1634
        %v1636 = vrot.slane %v1635, 1
        %v1637 = vmax.f32 %v1635, %v1636
        %v1638 = vrot.slane %v1592, 4
        %v1639 = vmax.f32 %v1592, %v1638
        %v1640 = vrot.slane %v1639, 2
        %v1641 = vmax.f32 %v1639, %v1640
        %v1642 = vrot.slane %v1641, 1
        %v1643 = vmax.f32 %v1641, %v1642
        %v1644 = vrot.slane %v1593, 4
        %v1645 = vmax.f32 %v1593, %v1644
        %v1646 = vrot.slane %v1645, 2
        %v1647 = vmax.f32 %v1645, %v1646
        %v1648 = vrot.slane %v1647, 1
        %v1649 = vmax.f32 %v1647, %v1648
        %v1650 = vrot.slane %v1594, 4
        %v1651 = vmax.f32 %v1594, %v1650
        %v1652 = vrot.slane %v1651, 2
        %v1653 = vmax.f32 %v1651, %v1652
        %v1654 = vrot.slane %v1653, 1
        %v1655 = vmax.f32 %v1653, %v1654
        %v1656 = vrot.slane %v1595, 4
        %v1657 = vmax.f32 %v1595, %v1656
        %v1658 = vrot.slane %v1657, 2
        %v1659 = vmax.f32 %v1657, %v1658
        %v1660 = vrot.slane %v1659, 1
        %v1661 = vmax.f32 %v1659, %v1660
        %v1662 = vrot.slane %v1596, 4
        %v1663 = vmax.f32 %v1596, %v1662
        %v1664 = vrot.slane %v1663, 2
        %v1665 = vmax.f32 %v1663, %v1664
        %v1666 = vrot.slane %v1665, 1
        %v1667 = vmax.f32 %v1665, %v1666
        %v1668 = vrot.slane %v1597, 4
        %v1669 = vmax.f32 %v1597, %v1668
        %v1670 = vrot.slane %v1669, 2
        %v1671 = vmax.f32 %v1669, %v1670
        %v1672 = vrot.slane %v1671, 1
        %v1673 = vmax.f32 %v1671, %v1672
        %v1674 = vrot.slane %v1598, 4
        %v1675 = vmax.f32 %v1598, %v1674
        %v1676 = vrot.slane %v1675, 2
        %v1677 = vmax.f32 %v1675, %v1676
        %v1678 = vrot.slane %v1677, 1
        %v1679 = vmax.f32 %v1677, %v1678
        %v1680 = vrot.slane %v1599, 4
        %v1681 = vmax.f32 %v1599, %v1680
        %v1682 = vrot.slane %v1681, 2
        %v1683 = vmax.f32 %v1681, %v1682
        %v1684 = vrot.slane %v1683, 1
        %v1685 = vmax.f32 %v1683, %v1684
        %v1686 = vrot.slane %v1600, 4
        %v1687 = vmax.f32 %v1600, %v1686
        %v1688 = vrot.slane %v1687, 2
        %v1689 = vmax.f32 %v1687, %v1688
        %v1690 = vrot.slane %v1689, 1
        %v1691 = vmax.f32 %v1689, %v1690
        %v1692 = vrot.slane %v1601, 4
        %v1693 = vmax.f32 %v1601, %v1692
        %v1694 = vrot.slane %v1693, 2
        %v1695 = vmax.f32 %v1693, %v1694
        %v1696 = vrot.slane %v1695, 1
        %v1697 = vmax.f32 %v1695, %v1696
        %v1698 = vlaneseq
        %v1699 = vshrl.u32 %v1698, 7
        %vm1700 = vcmp.ge.f32.partialorder %v1586, %v1607
        %vm1701 = vcmp.ge.f32.partialorder %v1587, %v1613
        %vm1702 = vcmp.ge.f32.partialorder %v1588, %v1619
        %vm1703 = vcmp.ge.f32.partialorder %v1589, %v1625
        %vm1704 = vcmp.ge.f32.partialorder %v1590, %v1631
        %vm1705 = vcmp.ge.f32.partialorder %v1591, %v1637
        %vm1706 = vcmp.ge.f32.partialorder %v1592, %v1643
        %vm1707 = vcmp.ge.f32.partialorder %v1593, %v1649
        %vm1708 = vcmp.ge.f32.partialorder %v1594, %v1655
        %vm1709 = vcmp.ge.f32.partialorder %v1595, %v1661
        %vm1710 = vcmp.ge.f32.partialorder %v1596, %v1667
        %vm1711 = vcmp.ge.f32.partialorder %v1597, %v1673
        %vm1712 = vcmp.ge.f32.partialorder %v1598, %v1679
        %vm1713 = vcmp.ge.f32.partialorder %v1599, %v1685
        %vm1714 = vcmp.ge.f32.partialorder %v1600, %v1691
        %vm1715 = vcmp.ge.f32.partialorder %v1601, %v1697
        %v1716 = vsel %vm1700, %v1699, 8
        %v1717 = vsel %vm1701, %v1699, 8
        %v1718 = vsel %vm1702, %v1699, 8
        %v1719 = vsel %vm1703, %v1699, 8
        %v1720 = vsel %vm1704, %v1699, 8
        %v1721 = vsel %vm1705, %v1699, 8
        %v1722 = vsel %vm1706, %v1699, 8
        %v1723 = vsel %vm1707, %v1699, 8
        %v1724 = vsel %vm1708, %v1699, 8
        %v1725 = vsel %vm1709, %v1699, 8
        %v1726 = vsel %vm1710, %v1699, 8
        %v1727 = vsel %vm1711, %v1699, 8
        %v1728 = vsel %vm1712, %v1699, 8
        %v1729 = vsel %vm1713, %v1699, 8
        %v1730 = vsel %vm1714, %v1699, 8
        %v1731 = vsel %vm1715, %v1699, 8
        %v1732 = vrot.slane %v1716, 4
        %vm1733 = vcmp.lt.s32.totalorder %v1716, %v1732
        %v1734 = vsel %vm1733, %v1716, %v1732
        %v1735 = vrot.slane %v1734, 2
        %vm1736 = vcmp.lt.s32.totalorder %v1734, %v1735
        %v1737 = vsel %vm1736, %v1734, %v1735
        %v1738 = vrot.slane %v1737, 1
        %vm1739 = vcmp.lt.s32.totalorder %v1737, %v1738
        %v1740 = vsel %vm1739, %v1737, %v1738
        %v1741 = vrot.slane %v1717, 4
        %vm1742 = vcmp.lt.s32.totalorder %v1717, %v1741
        %v1743 = vsel %vm1742, %v1717, %v1741
        %v1744 = vrot.slane %v1743, 2
        %vm1745 = vcmp.lt.s32.totalorder %v1743, %v1744
        %v1746 = vsel %vm1745, %v1743, %v1744
        %v1747 = vrot.slane %v1746, 1
        %vm1748 = vcmp.lt.s32.totalorder %v1746, %v1747
        %v1749 = vsel %vm1748, %v1746, %v1747
        %v1750 = vrot.slane %v1718, 4
        %vm1751 = vcmp.lt.s32.totalorder %v1718, %v1750
        %v1752 = vsel %vm1751, %v1718, %v1750
        %v1753 = vrot.slane %v1752, 2
        %vm1754 = vcmp.lt.s32.totalorder %v1752, %v1753
        %v1755 = vsel %vm1754, %v1752, %v1753
        %v1756 = vrot.slane %v1755, 1
        %vm1757 = vcmp.lt.s32.totalorder %v1755, %v1756
        %v1758 = vsel %vm1757, %v1755, %v1756
        %v1759 = vrot.slane %v1719, 4
        %vm1760 = vcmp.lt.s32.totalorder %v1719, %v1759
        %v1761 = vsel %vm1760, %v1719, %v1759
        %v1762 = vrot.slane %v1761, 2
        %vm1763 = vcmp.lt.s32.totalorder %v1761, %v1762
        %v1764 = vsel %vm1763, %v1761, %v1762
        %v1765 = vrot.slane %v1764, 1
        %vm1766 = vcmp.lt.s32.totalorder %v1764, %v1765
        %v1767 = vsel %vm1766, %v1764, %v1765
        %v1768 = vrot.slane %v1720, 4
        %vm1769 = vcmp.lt.s32.totalorder %v1720, %v1768
        %v1770 = vsel %vm1769, %v1720, %v1768
        %v1771 = vrot.slane %v1770, 2
        %vm1772 = vcmp.lt.s32.totalorder %v1770, %v1771
        %v1773 = vsel %vm1772, %v1770, %v1771
        %v1774 = vrot.slane %v1773, 1
        %vm1775 = vcmp.lt.s32.totalorder %v1773, %v1774
        %v1776 = vsel %vm1775, %v1773, %v1774
        %v1777 = vrot.slane %v1721, 4
        %vm1778 = vcmp.lt.s32.totalorder %v1721, %v1777
        %v1779 = vsel %vm1778, %v1721, %v1777
        %v1780 = vrot.slane %v1779, 2
        %vm1781 = vcmp.lt.s32.totalorder %v1779, %v1780
        %v1782 = vsel %vm1781, %v1779, %v1780
        %v1783 = vrot.slane %v1782, 1
        %vm1784 = vcmp.lt.s32.totalorder %v1782, %v1783
        %v1785 = vsel %vm1784, %v1782, %v1783
        %v1786 = vrot.slane %v1722, 4
        %vm1787 = vcmp.lt.s32.totalorder %v1722, %v1786
        %v1788 = vsel %vm1787, %v1722, %v1786
        %v1789 = vrot.slane %v1788, 2
        %vm1790 = vcmp.lt.s32.totalorder %v1788, %v1789
        %v1791 = vsel %vm1790, %v1788, %v1789
        %v1792 = vrot.slane %v1791, 1
        %vm1793 = vcmp.lt.s32.totalorder %v1791, %v1792
        %v1794 = vsel %vm1793, %v1791, %v1792
        %v1795 = vrot.slane %v1723, 4
        %vm1796 = vcmp.lt.s32.totalorder %v1723, %v1795
        %v1797 = vsel %vm1796, %v1723, %v1795
        %v1798 = vrot.slane %v1797, 2
        %vm1799 = vcmp.lt.s32.totalorder %v1797, %v1798
        %v1800 = vsel %vm1799, %v1797, %v1798
        %v1801 = vrot.slane %v1800, 1
        %vm1802 = vcmp.lt.s32.totalorder %v1800, %v1801
        %v1803 = vsel %vm1802, %v1800, %v1801
        %v1804 = vrot.slane %v1724, 4
        %vm1805 = vcmp.lt.s32.totalorder %v1724, %v1804
        %v1806 = vsel %vm1805, %v1724, %v1804
        %v1807 = vrot.slane %v1806, 2
        %vm1808 = vcmp.lt.s32.totalorder %v1806, %v1807
        %v1809 = vsel %vm1808, %v1806, %v1807
        %v1810 = vrot.slane %v1809, 1
        %vm1811 = vcmp.lt.s32.totalorder %v1809, %v1810
        %v1812 = vsel %vm1811, %v1809, %v1810
        %v1813 = vrot.slane %v1725, 4
        %vm1814 = vcmp.lt.s32.totalorder %v1725, %v1813
        %v1815 = vsel %vm1814, %v1725, %v1813
        %v1816 = vrot.slane %v1815, 2
        %vm1817 = vcmp.lt.s32.totalorder %v1815, %v1816
        %v1818 = vsel %vm1817, %v1815, %v1816
        %v1819 = vrot.slane %v1818, 1
        %vm1820 = vcmp.lt.s32.totalorder %v1818, %v1819
        %v1821 = vsel %vm1820, %v1818, %v1819
        %v1822 = vrot.slane %v1726, 4
        %vm1823 = vcmp.lt.s32.totalorder %v1726, %v1822
        %v1824 = vsel %vm1823, %v1726, %v1822
        %v1825 = vrot.slane %v1824, 2
        %vm1826 = vcmp.lt.s32.totalorder %v1824, %v1825
        %v1827 = vsel %vm1826, %v1824, %v1825
        %v1828 = vrot.slane %v1827, 1
        %vm1829 = vcmp.lt.s32.totalorder %v1827, %v1828
        %v1830 = vsel %vm1829, %v1827, %v1828
        %v1831 = vrot.slane %v1727, 4
        %vm1832 = vcmp.lt.s32.totalorder %v1727, %v1831
        %v1833 = vsel %vm1832, %v1727, %v1831
        %v1834 = vrot.slane %v1833, 2
        %vm1835 = vcmp.lt.s32.totalorder %v1833, %v1834
        %v1836 = vsel %vm1835, %v1833, %v1834
        %v1837 = vrot.slane %v1836, 1
        %vm1838 = vcmp.lt.s32.totalorder %v1836, %v1837
        %v1839 = vsel %vm1838, %v1836, %v1837
        %v1840 = vrot.slane %v1728, 4
        %vm1841 = vcmp.lt.s32.totalorder %v1728, %v1840
        %v1842 = vsel %vm1841, %v1728, %v1840
        %v1843 = vrot.slane %v1842, 2
        %vm1844 = vcmp.lt.s32.totalorder %v1842, %v1843
        %v1845 = vsel %vm1844, %v1842, %v1843
        %v1846 = vrot.slane %v1845, 1
        %vm1847 = vcmp.lt.s32.totalorder %v1845, %v1846
        %v1848 = vsel %vm1847, %v1845, %v1846
        %v1849 = vrot.slane %v1729, 4
        %vm1850 = vcmp.lt.s32.totalorder %v1729, %v1849
        %v1851 = vsel %vm1850, %v1729, %v1849
        %v1852 = vrot.slane %v1851, 2
        %vm1853 = vcmp.lt.s32.totalorder %v1851, %v1852
        %v1854 = vsel %vm1853, %v1851, %v1852
        %v1855 = vrot.slane %v1854, 1
        %vm1856 = vcmp.lt.s32.totalorder %v1854, %v1855
        %v1857 = vsel %vm1856, %v1854, %v1855
        %v1858 = vrot.slane %v1730, 4
        %vm1859 = vcmp.lt.s32.totalorder %v1730, %v1858
        %v1860 = vsel %vm1859, %v1730, %v1858
        %v1861 = vrot.slane %v1860, 2
        %vm1862 = vcmp.lt.s32.totalorder %v1860, %v1861
        %v1863 = vsel %vm1862, %v1860, %v1861
        %v1864 = vrot.slane %v1863, 1
        %vm1865 = vcmp.lt.s32.totalorder %v1863, %v1864
        %v1866 = vsel %vm1865, %v1863, %v1864
        %v1867 = vrot.slane %v1731, 4
        %vm1868 = vcmp.lt.s32.totalorder %v1731, %v1867
        %v1869 = vsel %vm1868, %v1731, %v1867
        %v1870 = vrot.slane %v1869, 2
        %vm1871 = vcmp.lt.s32.totalorder %v1869, %v1870
        %v1872 = vsel %vm1871, %v1869, %v1870
        %v1873 = vrot.slane %v1872, 1
        %vm1874 = vcmp.lt.s32.totalorder %v1872, %v1873
        %v1875 = vsel %vm1874, %v1872, %v1873
        %vm1876 = vcmp.ge.f32.partialorder %v1607, 0.5
        %vm1877 = vcmp.ge.f32.partialorder %v1613, 0.5
        %vm1878 = vcmp.ge.f32.partialorder %v1619, 0.5
        %vm1879 = vcmp.ge.f32.partialorder %v1625, 0.5
        %vm1880 = vcmp.ge.f32.partialorder %v1631, 0.5
        %vm1881 = vcmp.ge.f32.partialorder %v1637, 0.5
        %vm1882 = vcmp.ge.f32.partialorder %v1643, 0.5
        %vm1883 = vcmp.ge.f32.partialorder %v1649, 0.5
        %vm1884 = vcmp.ge.f32.partialorder %v1655, 0.5
        %vm1885 = vcmp.ge.f32.partialorder %v1661, 0.5
        %vm1886 = vcmp.ge.f32.partialorder %v1667, 0.5
        %vm1887 = vcmp.ge.f32.partialorder %v1673, 0.5
        %vm1888 = vcmp.ge.f32.partialorder %v1679, 0.5
        %vm1889 = vcmp.ge.f32.partialorder %v1685, 0.5
        %vm1890 = vcmp.ge.f32.partialorder %v1691, 0.5
        %vm1891 = vcmp.ge.f32.partialorder %v1697, 0.5
        %vm1892 = vcmp.eq.s32.totalorder %v1699, %v1740
        %vm1893 = vcmp.eq.s32.totalorder %v1699, %v1749
        %vm1894 = vcmp.eq.s32.totalorder %v1699, %v1758
        %vm1895 = vcmp.eq.s32.totalorder %v1699, %v1767
        %vm1896 = vcmp.eq.s32.totalorder %v1699, %v1776
        %vm1897 = vcmp.eq.s32.totalorder %v1699, %v1785
        %vm1898 = vcmp.eq.s32.totalorder %v1699, %v1794
        %vm1899 = vcmp.eq.s32.totalorder %v1699, %v1803
        %vm1900 = vcmp.eq.s32.totalorder %v1699, %v1812
        %vm1901 = vcmp.eq.s32.totalorder %v1699, %v1821
        %vm1902 = vcmp.eq.s32.totalorder %v1699, %v1830
        %vm1903 = vcmp.eq.s32.totalorder %v1699, %v1839
        %vm1904 = vcmp.eq.s32.totalorder %v1699, %v1848
        %vm1905 = vcmp.eq.s32.totalorder %v1699, %v1857
        %vm1906 = vcmp.eq.s32.totalorder %v1699, %v1866
        %vm1907 = vcmp.eq.s32.totalorder %v1699, %v1875
        %1908 = vset.pattern.permute.xlu0 0
        %1909 = vperm.xlu0 %1908, %v306
        %v1910 = vpop.permute.xlu0 %1909
        %1911 = vset.pattern.permute.xlu0 0
        %1912 = vperm.xlu0 %1911, %v307
        %v1913 = vpop.permute.xlu0 %1912
        %1914 = vset.pattern.permute.xlu0 0
        %1915 = vperm.xlu0 %1914, %v308
        %v1916 = vpop.permute.xlu0 %1915
        %1917 = vset.pattern.permute.xlu0 0
        %1918 = vperm.xlu0 %1917, %v309
        %v1919 = vpop.permute.xlu0 %1918
        %1920 = vset.pattern.permute.xlu0 0
        %1921 = vperm.xlu0 %1920, %v310
        %v1922 = vpop.permute.xlu0 %1921
        %1923 = vset.pattern.permute.xlu0 0
        %1924 = vperm.xlu0 %1923, %v311
        %v1925 = vpop.permute.xlu0 %1924
        %1926 = vset.pattern.permute.xlu0 0
        %1927 = vperm.xlu0 %1926, %v312
        %v1928 = vpop.permute.xlu0 %1927
        %1929 = vset.pattern.permute.xlu0 0
        %1930 = vperm.xlu0 %1929, %v313
        %v1931 = vpop.permute.xlu0 %1930
        %v1932 = vsel %vm1892, %v1910, 0
        %v1933 = vsel %vm1893, %v1910, 0
        %v1934 = vsel %vm1894, %v1913, 0
        %v1935 = vsel %vm1895, %v1913, 0
        %v1936 = vsel %vm1896, %v1916, 0
        %v1937 = vsel %vm1897, %v1916, 0
        %v1938 = vsel %vm1898, %v1919, 0
        %v1939 = vsel %vm1899, %v1919, 0
        %v1940 = vsel %vm1900, %v1922, 0
        %v1941 = vsel %vm1901, %v1922, 0
        %v1942 = vsel %vm1902, %v1925, 0
        %v1943 = vsel %vm1903, %v1925, 0
        %v1944 = vsel %vm1904, %v1928, 0
        %v1945 = vsel %vm1905, %v1928, 0
        %v1946 = vsel %vm1906, %v1931, 0
        %v1947 = vsel %vm1907, %v1931, 0
        %v1948 = vrot.slane %v1932, 4
        %v1949 = vadd.s32 %v1932, %v1948
        %v1950 = vrot.slane %v1949, 2
        %v1951 = vadd.s32 %v1949, %v1950
        %v1952 = vrot.slane %v1951, 1
        %v1953 = vadd.s32 %v1951, %v1952
        %v1954 = vrot.slane %v1933, 4
        %v1955 = vadd.s32 %v1933, %v1954
        %v1956 = vrot.slane %v1955, 2
        %v1957 = vadd.s32 %v1955, %v1956
        %v1958 = vrot.slane %v1957, 1
        %v1959 = vadd.s32 %v1957, %v1958
        %v1960 = vrot.slane %v1934, 4
        %v1961 = vadd.s32 %v1934, %v1960
        %v1962 = vrot.slane %v1961, 2
        %v1963 = vadd.s32 %v1961, %v1962
        %v1964 = vrot.slane %v1963, 1
        %v1965 = vadd.s32 %v1963, %v1964
        %v1966 = vrot.slane %v1935, 4
        %v1967 = vadd.s32 %v1935, %v1966
        %v1968 = vrot.slane %v1967, 2
        %v1969 = vadd.s32 %v1967, %v1968
        %v1970 = vrot.slane %v1969, 1
        %v1971 = vadd.s32 %v1969, %v1970
        %v1972 = vrot.slane %v1936, 4
        %v1973 = vadd.s32 %v1936, %v1972
        %v1974 = vrot.slane %v1973, 2
        %v1975 = vadd.s32 %v1973, %v1974
        %v1976 = vrot.slane %v1975, 1
        %v1977 = vadd.s32 %v1975, %v1976
        %v1978 = vrot.slane %v1937, 4
        %v1979 = vadd.s32 %v1937, %v1978
        %v1980 = vrot.slane %v1979, 2
        %v1981 = vadd.s32 %v1979, %v1980
        %v1982 = vrot.slane %v1981, 1
        %v1983 = vadd.s32 %v1981, %v1982
        %v1984 = vrot.slane %v1938, 4
        %v1985 = vadd.s32 %v1938, %v1984
        %v1986 = vrot.slane %v1985, 2
        %v1987 = vadd.s32 %v1985, %v1986
        %v1988 = vrot.slane %v1987, 1
        %v1989 = vadd.s32 %v1987, %v1988
        %v1990 = vrot.slane %v1939, 4
        %v1991 = vadd.s32 %v1939, %v1990
        %v1992 = vrot.slane %v1991, 2
        %v1993 = vadd.s32 %v1991, %v1992
        %v1994 = vrot.slane %v1993, 1
        %v1995 = vadd.s32 %v1993, %v1994
        %v1996 = vrot.slane %v1940, 4
        %v1997 = vadd.s32 %v1940, %v1996
        %v1998 = vrot.slane %v1997, 2
        %v1999 = vadd.s32 %v1997, %v1998
        %v2000 = vrot.slane %v1999, 1
        %v2001 = vadd.s32 %v1999, %v2000
        %v2002 = vrot.slane %v1941, 4
        %v2003 = vadd.s32 %v1941, %v2002
        %v2004 = vrot.slane %v2003, 2
        %v2005 = vadd.s32 %v2003, %v2004
        %v2006 = vrot.slane %v2005, 1
        %v2007 = vadd.s32 %v2005, %v2006
        %v2008 = vrot.slane %v1942, 4
        %v2009 = vadd.s32 %v1942, %v2008
        %v2010 = vrot.slane %v2009, 2
        %v2011 = vadd.s32 %v2009, %v2010
        %v2012 = vrot.slane %v2011, 1
        %v2013 = vadd.s32 %v2011, %v2012
        %v2014 = vrot.slane %v1943, 4
        %v2015 = vadd.s32 %v1943, %v2014
        %v2016 = vrot.slane %v2015, 2
        %v2017 = vadd.s32 %v2015, %v2016
        %v2018 = vrot.slane %v2017, 1
        %v2019 = vadd.s32 %v2017, %v2018
        %v2020 = vrot.slane %v1944, 4
        %v2021 = vadd.s32 %v1944, %v2020
        %v2022 = vrot.slane %v2021, 2
        %v2023 = vadd.s32 %v2021, %v2022
        %v2024 = vrot.slane %v2023, 1
        %v2025 = vadd.s32 %v2023, %v2024
        %v2026 = vrot.slane %v1945, 4
        %v2027 = vadd.s32 %v1945, %v2026
        %v2028 = vrot.slane %v2027, 2
        %v2029 = vadd.s32 %v2027, %v2028
        %v2030 = vrot.slane %v2029, 1
        %v2031 = vadd.s32 %v2029, %v2030
        %v2032 = vrot.slane %v1946, 4
        %v2033 = vadd.s32 %v1946, %v2032
        %v2034 = vrot.slane %v2033, 2
        %v2035 = vadd.s32 %v2033, %v2034
        %v2036 = vrot.slane %v2035, 1
        %v2037 = vadd.s32 %v2035, %v2036
        %v2038 = vrot.slane %v1947, 4
        %v2039 = vadd.s32 %v1947, %v2038
        %v2040 = vrot.slane %v2039, 2
        %v2041 = vadd.s32 %v2039, %v2040
        %v2042 = vrot.slane %v2041, 1
        %v2043 = vadd.s32 %v2041, %v2042
        %v2044 = vsel %vm1876, %v1953, 8
        %v2045 = vsel %vm1877, %v1959, 8
        %v2046 = vsel %vm1878, %v1965, 8
        %v2047 = vsel %vm1879, %v1971, 8
        %v2048 = vsel %vm1880, %v1977, 8
        %v2049 = vsel %vm1881, %v1983, 8
        %v2050 = vsel %vm1882, %v1989, 8
        %v2051 = vsel %vm1883, %v1995, 8
        %v2052 = vsel %vm1884, %v2001, 8
        %v2053 = vsel %vm1885, %v2007, 8
        %v2054 = vsel %vm1886, %v2013, 8
        %v2055 = vsel %vm1887, %v2019, 8
        %v2056 = vsel %vm1888, %v2025, 8
        %v2057 = vsel %vm1889, %v2031, 8
        %v2058 = vsel %vm1890, %v2037, 8
        %v2059 = vsel %vm1891, %v2043, 8
        %vm2076 = vcmask 1041409
        %v2077 = vsel %vm2076, %v1619, %v1607
        %vm2078 = vcmask 1042434
        %v2079 = vsel %vm2078, %v1631, %v2077
        %vm2080 = vcmask 1043459
        %v2081 = vsel %vm2080, %v1643, %v2079
        %vm2082 = vcmask 1044484
        %v2083 = vsel %vm2082, %v1655, %v2081
        %vm2084 = vcmask 1045509
        %v2085 = vsel %vm2084, %v1667, %v2083
        %vm2086 = vcmask 1046534
        %v2087 = vsel %vm2086, %v1679, %v2085
        %vm2088 = vcmask 1047559
        %v2089 = vsel %vm2088, %v1691, %v2087
        %v2090 = vsel %vm2076, %v1625, %v1613
        %v2091 = vsel %vm2078, %v1637, %v2090
        %v2092 = vsel %vm2080, %v1649, %v2091
        %v2093 = vsel %vm2082, %v1661, %v2092
        %v2094 = vsel %vm2084, %v1673, %v2093
        %v2095 = vsel %vm2086, %v1685, %v2094
        %v2096 = vsel %vm2088, %v1697, %v2095
        %2099 = vst [vmem:[%s256] sm:$0xff] %v2089
        %2100 = vst [vmem:[%s256 + $0x8] sm:$0xff] %v2096
        %v2101 = vsel %vm2076, %v1758, %v1740
        %v2102 = vsel %vm2078, %v1776, %v2101
        %v2103 = vsel %vm2080, %v1794, %v2102
        %v2104 = vsel %vm2082, %v1812, %v2103
        %v2105 = vsel %vm2084, %v1830, %v2104
        %v2106 = vsel %vm2086, %v1848, %v2105
        %v2107 = vsel %vm2088, %v1866, %v2106
        %v2108 = vsel %vm2076, %v1767, %v1749
        %v2109 = vsel %vm2078, %v1785, %v2108
        %v2110 = vsel %vm2080, %v1803, %v2109
        %v2111 = vsel %vm2082, %v1821, %v2110
        %v2112 = vsel %vm2084, %v1839, %v2111
        %v2113 = vsel %vm2086, %v1857, %v2112
        %v2114 = vsel %vm2088, %v1875, %v2113
        %2115 = vst [vmem:[%s263] sm:$0xff] %v2107
        %2116 = vst [vmem:[%s263 + $0x8] sm:$0xff] %v2114
        %v2117 = vsel %vm2076, %v2046, %v2044
        %v2118 = vsel %vm2078, %v2048, %v2117
        %v2119 = vsel %vm2080, %v2050, %v2118
        %v2120 = vsel %vm2082, %v2052, %v2119
        %v2121 = vsel %vm2084, %v2054, %v2120
        %v2122 = vsel %vm2086, %v2056, %v2121
        %v2123 = vsel %vm2088, %v2058, %v2122
        %v2124 = vsel %vm2076, %v2047, %v2045
        %v2125 = vsel %vm2078, %v2049, %v2124
        %v2126 = vsel %vm2080, %v2051, %v2125
        %v2127 = vsel %vm2082, %v2053, %v2126
        %v2128 = vsel %vm2084, %v2055, %v2127
        %v2129 = vsel %vm2086, %v2057, %v2128
        %v2130 = vsel %vm2088, %v2059, %v2129
        %2131 = vst [vmem:[%s270] sm:$0xff] %v2123
        %2132 = vst [vmem:[%s270 + $0x8] sm:$0xff] %v2130
        %s2133 = sand.u32 %s109, 1
        %s2134 = scalar_lea.sflag [#allocation3], %s2133
        %s2135 = sand.u32 %s109, 1
        %s2136 = smul.addr %s2135, 16
        %s2137 = scalar_lea.vmem [#allocation2], %s2136
        %s2138 = sand.u32 %s23, 1
        %s2139 = scalar_lea.sflag [#allocation5], %s2138
        %s2140 = sand.u32 %s135, 1
        %s2141 = smul.addr %s2140, 16
        %s2142 = scalar_lea.vmem [#allocation4], %s2141
        %s2143 = sand.u32 %s23, 1
        %s2144 = scalar_lea.sflag [#allocation5], %s2143
        %s2145 = sand.u32 %s161, 1
        %s2146 = smul.addr %s2145, 16
        %s2147 = scalar_lea.vmem [#allocation6], %s2146
        // Predicated region
        $region33: #{tpu_custom_call.1} parent=31 // pred_check
          %p2148 = pneg %p119
        $region34: #{tpu_custom_call.1} parent=31 // pred_check_branch
          %2150 = sbr.rel (%p2148) target = $region36
        $region35: #{tpu_custom_call.1} parent=31 // pred_region
          %s2152 = ssub.s32 256, 256
          %2153 = vsyncadd %s2134, %s2152
          %s2154 = smul.addr %s23, 2
          %s2155 = smul.addr %s2154, 128
          %s2156 = scalar_lea.hbm %s3, %s2155
          %s2158 = sshll.u32 %s2137, 4
          %s2159 = int_to_ptr.vmem [resolvable:$true] %s2158
          %2161 = dma.vmem_to_hbm [thread:$0]  %s2159, 256, %s2156, %s2134
        $region36: #{tpu_custom_call.1} parent=31 // pred_fallthru
          _
        // Predicated region
        $region37: #{tpu_custom_call.1} parent=31 // pred_check
          %p2162 = pneg %p145
        $region38: #{tpu_custom_call.1} parent=31 // pred_check_branch
          %2164 = sbr.rel (%p2162) target = $region40
        $region39: #{tpu_custom_call.1} parent=31 // pred_region
          %s2166 = ssub.s32 256, 256
          %2167 = vsyncadd %s2139, %s2166
          %s2168 = smul.addr %s23, 2
          %s2169 = smul.addr %s2168, 128
          %s2170 = scalar_lea.hbm %s4, %s2169
          %s2172 = sshll.u32 %s2142, 4
          %s2173 = int_to_ptr.vmem [resolvable:$true] %s2172
          %2175 = dma.vmem_to_hbm [thread:$0]  %s2173, 256, %s2170, %s2139
        $region40: #{tpu_custom_call.1} parent=31 // pred_fallthru
          _
        // Predicated region
        $region41: #{tpu_custom_call.1} parent=31 // pred_check
          %p2176 = pneg %p171
        $region42: #{tpu_custom_call.1} parent=31 // pred_check_branch
          %2178 = sbr.rel (%p2176) target = $region44
        $region43: #{tpu_custom_call.1} parent=31 // pred_region
          %s2180 = ssub.s32 256, 256
          %2181 = vsyncadd %s2144, %s2180
          %s2182 = smul.addr %s23, 2
          %s2183 = smul.addr %s2182, 128
          %s2184 = scalar_lea.hbm %s5, %s2183
          %s2186 = sshll.u32 %s2147, 4
          %s2187 = int_to_ptr.vmem [resolvable:$true] %s2186
          %2189 = dma.vmem_to_hbm [thread:$0]  %s2187, 256, %s2184, %s2144
        $region44: #{tpu_custom_call.1} parent=31 // pred_fallthru
          _
      $region32: #{tpu_custom_call.1} parent=5 // pred_fallthru
        _
      %p2190 = scmp.le.s32.totalorder 2, %s18
      // Predicated region
      $region45: #{tpu_custom_call.1} parent=5 // pred_check
        %p2191 = pneg %p2190
      $region46: #{tpu_custom_call.1} parent=5 // pred_check_branch
        %2193 = sbr.rel (%p2191) target = $region48
      $region47: #{tpu_custom_call.1} parent=5 // pred_region
        %s2194 = ssub.s32 %s18, 2
        // Predicated region
        $region49: #{tpu_custom_call.1} parent=47 // pred_check
          %p2195 = pneg %p125
        $region50: #{tpu_custom_call.1} parent=47 // pred_check_branch
          %2197 = sbr.rel (%p2195) target = $region52
        $region51: #{tpu_custom_call.1} parent=47 // pred_region
          %s2198 = sand.u32 %s110, 1
          %s2199 = scalar_lea.sflag [#allocation3], %s2198
          %s2200 = sand.u32 %s110, 1
          %s2201 = smul.addr %s2200, 16
          %s2202 = scalar_lea.vmem [#allocation2], %s2201
          %2203 = dma.done %s2199, 256
        $region52: #{tpu_custom_call.1} parent=47 // pred_fallthru
          _
        // Predicated region
        $region53: #{tpu_custom_call.1} parent=47 // pred_check
          %p2204 = pneg %p151
        $region54: #{tpu_custom_call.1} parent=47 // pred_check_branch
          %2206 = sbr.rel (%p2204) target = $region56
        $region55: #{tpu_custom_call.1} parent=47 // pred_region
          %s2207 = sand.u32 %s24, 1
          %s2208 = scalar_lea.sflag [#allocation5], %s2207
          %s2209 = sand.u32 %s136, 1
          %s2210 = smul.addr %s2209, 16
          %s2211 = scalar_lea.vmem [#allocation4], %s2210
          %2212 = dma.done %s2208, 256
        $region56: #{tpu_custom_call.1} parent=47 // pred_fallthru
          _
        // Predicated region
        $region57: #{tpu_custom_call.1} parent=47 // pred_check
          %p2213 = pneg %p177
        $region58: #{tpu_custom_call.1} parent=47 // pred_check_branch
          %2215 = sbr.rel (%p2213) target = $region60
        $region59: #{tpu_custom_call.1} parent=47 // pred_region
          %s2216 = sand.u32 %s24, 1
          %s2217 = scalar_lea.sflag [#allocation5], %s2216
          %s2218 = sand.u32 %s162, 1
          %s2219 = smul.addr %s2218, 16
          %s2220 = scalar_lea.vmem [#allocation6], %s2219
          %2221 = dma.done %s2217, 256
        $region60: #{tpu_custom_call.1} parent=47 // pred_fallthru
          _
      $region48: #{tpu_custom_call.1} parent=5 // pred_fallthru
        _
    $region6: #{tpu_custom_call.1} parent=1 // loop_footer
      %s22 = sadd.s32 1, %s18
    $region7: #{tpu_custom_call.1} parent=1 // loop_footer_branch
      %17 = sbr.rel target = $region3
    $region8: #{tpu_custom_call.1} parent=1 // loop_exit
      _
    %2222 = vsyncpa [#allocation3], 1
    %s2223 = scalar_lea.sflag [#allocation3], 1
    %2224 = vsyncpa %s2223, 1
    %2225 = vsyncpa [#allocation5], 1
    %s2226 = scalar_lea.sflag [#allocation5], 1
    %2227 = vsyncpa %s2226, 1

</llo_original>
